<compile_context>
chip_gen: v6e
topology: v6e:2x2x1
jax: 0.10.0
libtpu: 0.0.40
codegen_flags: <defaults>
</compile_context>

<pallas_src>
import functools

import jax
import jax.numpy as jnp
from jax.experimental import pallas as pl
from jax.experimental.pallas import tpu as pltpu


def _layernorm(x, gamma, beta, eps=1e-5):
    mu = jnp.mean(x, axis=-1, keepdims=True)
    var = jnp.mean((x - mu) ** 2, axis=-1, keepdims=True)
    return (x - mu) * jax.lax.rsqrt(var + eps) * gamma + beta


def bert_layers_kernel(vl_ref, x_ref,
                       wqkv_ref, bqkv_ref, wo_ref, bo_ref,
                       g1_ref, be1_ref, w1_ref, b1_ref, w2_ref, b2_ref,
                       g2_ref, be2_ref,
                       out_ref, act_ref, *, num_heads):
    b = pl.program_id(0)          # batch element   (parallel axis)
    l = pl.program_id(1)          # encoder layer   (arbitrary / carry axis)
    vl = vl_ref[b]                # valid length for this batch element

    # Layer 0: load the embedding activations into the carried VMEM scratch.
    @pl.when(l == 0)
    def _():
        act_ref[...] = x_ref[0]

    x = act_ref[...]                               # (T, H) f32
    T, H = x.shape
    nh = num_heads
    hd = H // nh
    scale = 1.0 / (hd ** 0.5)

    # ---- Multi-head self-attention ----------------------------------------
    # Fused QKV projection: one MXU push with N = 3H (bf16 operands, f32 acc).
    x_bf = x.astype(jnp.bfloat16)
    qkv = jnp.dot(x_bf, wqkv_ref[0],
                  preferred_element_type=jnp.float32) + bqkv_ref[0]  # (T, 3H)

    q = qkv[:, :H] * scale                          # fold 1/sqrt(hd) once
    k = qkv[:, H:2 * H]
    v = qkv[:, 2 * H:]

    # (T, H) -> (nh, T, hd); batched attention over heads (no per-head loop).
    qh = jnp.transpose(q.reshape(T, nh, hd), (1, 0, 2)).astype(jnp.bfloat16)
    kh = jnp.transpose(k.reshape(T, nh, hd), (1, 0, 2)).astype(jnp.bfloat16)
    vh = jnp.transpose(v.reshape(T, nh, hd), (1, 0, 2)).astype(jnp.bfloat16)

    s = jnp.einsum('htd,hsd->hts', qh, kh,
                   preferred_element_type=jnp.float32)          # (nh, T, T) f32

    # d2l masked_softmax: keys at positions >= valid_len masked with -1e6.
    col = jax.lax.broadcasted_iota(jnp.int32, (nh, T, T), 2)
    s = jnp.where(col < vl, s, -1e6)
    s = s - jnp.max(s, axis=-1, keepdims=True)
    e = jnp.exp(s)
    p = e * pl.reciprocal(jnp.sum(e, axis=-1, keepdims=True), approx=True)

    ctx = jnp.einsum('hts,hsd->htd', p.astype(jnp.bfloat16), vh,
                     preferred_element_type=jnp.float32)        # (nh, T, hd)
    attn = jnp.transpose(ctx, (1, 0, 2)).reshape(T, H)          # (T, H) f32

    o = jnp.dot(attn.astype(jnp.bfloat16), wo_ref[0],
                preferred_element_type=jnp.float32) + bo_ref[0]
    y = _layernorm(x + o, g1_ref[0], be1_ref[0])                # AddNorm 1 (f32)

    # ---- Position-wise FFN: relu(y @ W1 + b1) @ W2 + b2 --------------------
    h1 = jnp.dot(y.astype(jnp.bfloat16), w1_ref[0],
                 preferred_element_type=jnp.float32) + b1_ref[0]
    h1 = jnp.maximum(h1, 0.0)
    f = jnp.dot(h1.astype(jnp.bfloat16), w2_ref[0],
                preferred_element_type=jnp.float32) + b2_ref[0]
    y2 = _layernorm(y + f, g2_ref[0], be2_ref[0])               # AddNorm 2 (f32)

    # Carry to the next layer; emit only after the last layer.
    act_ref[...] = y2

    @pl.when(l == pl.num_programs(1) - 1)
    def _():
        out_ref[0] = y2


def bert_encoder_layers(x, valid_lens, stacked, num_heads):
    """Runs all encoder layers in a single pallas_call.

    x:          (B, T, H) f32 embedded inputs.
    valid_lens: (B,) int32 — scalar-prefetched into SMEM.
    stacked:    tuple of per-layer weights stacked on a leading L axis.
    """
    B, T, H = x.shape
    L = stacked[0].shape[0]
    kernel = functools.partial(bert_layers_kernel, num_heads=num_heads)

    def act_map(b, l, vl):      # activation / output block: per batch element
        return (b, 0, 0)

    def w_map(b, l, vl):        # weights: stream per layer
        return (l, 0, 0)

    x_spec = pl.BlockSpec((1, T, H), act_map)
    w_specs = [pl.BlockSpec((1,) + w.shape[1:], w_map) for w in stacked]

    grid_spec = pltpu.PrefetchScalarGridSpec(
        num_scalar_prefetch=1,
        grid=(B, L),                       # layer axis innermost (carry)
        in_specs=[x_spec] + w_specs,
        out_specs=pl.BlockSpec((1, T, H), act_map),
        scratch_shapes=[pltpu.VMEM((T, H), jnp.float32)],  # carried activation
    )
    return pl.pallas_call(
        kernel,
        out_shape=jax.ShapeDtypeStruct((B, T, H), jnp.float32),
        grid_spec=grid_spec,
        compiler_params=pltpu.CompilerParams(
            dimension_semantics=("parallel", "arbitrary"),
            vmem_limit_bytes=64 * 1024 * 1024,   # explicit; leave headroom on v7x
        ),
    )(valid_lens, x, *stacked)


def bert_encoder_forward(tokens, segments, valid_lens, params, num_heads):
    # Embedding gathers are plain-JAX glue (data-dependent gather).
    T = tokens.shape[1]
    x = (params["token_embedding"][tokens]
         + params["segment_embedding"][segments]
         + params["pos_embedding"][:, :T, :]).astype(jnp.float32)
    return bert_encoder_layers(x, valid_lens, params["stacked"], num_heads)


def init_params(key, vocab_size, num_hiddens, ffn_num_hiddens,
                num_layers, max_len):
    H, F, L = num_hiddens, ffn_num_hiddens, num_layers
    keys = jax.random.split(key, 7)

    def normal(k, shape, scale=0.02, dtype=jnp.float32):
        return (scale * jax.random.normal(k, shape)).astype(dtype)

    bf = jnp.bfloat16
    params = {
        "token_embedding": normal(keys[0], (vocab_size, H), 1.0),
        "segment_embedding": normal(keys[1], (2, H), 1.0),
        "pos_embedding": normal(keys[2], (1, max_len, H), 1.0),
        # Per-layer weights stacked on a leading L axis; matmul weights in
        # bf16 (MXU operands), biases / LayerNorm params in f32.
        "stacked": (
            normal(keys[3], (L, H, 3 * H), dtype=bf),       # fused W_qkv
            jnp.zeros((L, 1, 3 * H), jnp.float32),           # b_qkv
            normal(keys[4], (L, H, H), dtype=bf),            # W_o
            jnp.zeros((L, 1, H), jnp.float32),                # b_o
            jnp.ones((L, 1, H), jnp.float32),                 # LN1 gamma
            jnp.zeros((L, 1, H), jnp.float32),                # LN1 beta
            normal(keys[5], (L, H, F), dtype=bf),             # FFN W1
            jnp.zeros((L, 1, F), jnp.float32),                # b1
            normal(keys[6], (L, F, H), dtype=bf),             # FFN W2
            jnp.zeros((L, 1, H), jnp.float32),                # b2
            jnp.ones((L, 1, H), jnp.float32),                 # LN2 gamma
            jnp.zeros((L, 1, H), jnp.float32),                # LN2 beta
        ),
    }
    return params


if __name__ == "__main__":
    vocab_size = 100
    num_hiddens = 32
    ffn_num_hiddens = 64
    num_heads = 4
    num_layers = 2
    max_len = 64
    B, T = 2, 8

    key = jax.random.PRNGKey(0)
    pkey, tkey = jax.random.split(key, 2)
    params = init_params(pkey, vocab_size, num_hiddens, ffn_num_hiddens,
                         num_layers, max_len)

    tokens = jax.random.randint(tkey, (B, T), 0, vocab_size, dtype=jnp.int32)
    segments = jnp.concatenate(
        [jnp.zeros((B, T // 2), jnp.int32), jnp.ones((B, T // 2), jnp.int32)],
        axis=1)
    valid_lens = jnp.array([T, 5], dtype=jnp.int32)

    out = bert_encoder_forward(tokens, segments, valid_lens, params, num_heads)
    jax.block_until_ready(out)
    assert out.shape == (B, T, num_hiddens)
    assert bool(jnp.all(jnp.isfinite(out)))
    print("KERNEL_OK")
</pallas_src>

<mosaic_0001>
module attributes {stable_mosaic.version = 11 : i64} {
  func.func @bert_layers_kernel(%arg0: i32, %arg1: i32, %arg2: memref<2xi32, #tpu.memory_space<smem>>, %arg3: memref<1x8x32xf32, #tpu.memory_space<vmem>>, %arg4: memref<1x32x96xbf16, #tpu.memory_space<vmem>>, %arg5: memref<1x1x96xf32, #tpu.memory_space<vmem>>, %arg6: memref<1x32x32xbf16, #tpu.memory_space<vmem>>, %arg7: memref<1x1x32xf32, #tpu.memory_space<vmem>>, %arg8: memref<1x1x32xf32, #tpu.memory_space<vmem>>, %arg9: memref<1x1x32xf32, #tpu.memory_space<vmem>>, %arg10: memref<1x32x64xbf16, #tpu.memory_space<vmem>>, %arg11: memref<1x1x64xf32, #tpu.memory_space<vmem>>, %arg12: memref<1x64x32xbf16, #tpu.memory_space<vmem>>, %arg13: memref<1x1x32xf32, #tpu.memory_space<vmem>>, %arg14: memref<1x1x32xf32, #tpu.memory_space<vmem>>, %arg15: memref<1x1x32xf32, #tpu.memory_space<vmem>>, %arg16: memref<1x8x32xf32, #tpu.memory_space<vmem>>, %arg17: memref<8x32xf32, #tpu.memory_space<vmem>>) attributes {dimension_semantics = [#tpu.dimension_semantics<parallel>, #tpu.dimension_semantics<arbitrary>], iteration_bounds = array<i64: 2, 2>, scalar_prefetch = 1 : i64, scratch_operands = 1 : i64, tpu.core_type = #tpu.core_type<tc>, window_params = [{transform_indices = @transform_0, window_bounds = array<i64: 1, 8, 32>}, {transform_indices = @transform_1, window_bounds = array<i64: 1, 32, 96>}, {transform_indices = @transform_2, window_bounds = array<i64: 1, 1, 96>}, {transform_indices = @transform_3, window_bounds = array<i64: 1, 32, 32>}, {transform_indices = @transform_4, window_bounds = array<i64: 1, 1, 32>}, {transform_indices = @transform_5, window_bounds = array<i64: 1, 1, 32>}, {transform_indices = @transform_6, window_bounds = array<i64: 1, 1, 32>}, {transform_indices = @transform_7, window_bounds = array<i64: 1, 32, 64>}, {transform_indices = @transform_8, window_bounds = array<i64: 1, 1, 64>}, {transform_indices = @transform_9, window_bounds = array<i64: 1, 64, 32>}, {transform_indices = @transform_10, window_bounds = array<i64: 1, 1, 32>}, {transform_indices = @transform_11, window_bounds = array<i64: 1, 1, 32>}, {transform_indices = @transform_12, window_bounds = array<i64: 1, 1, 32>}, {transform_indices = @transform_13, window_bounds = array<i64: 1, 8, 32>}]} {
    %0 = arith.index_cast %arg0 : i32 to index
    %1 = memref.load %arg2[%0] : memref<2xi32, #tpu.memory_space<smem>>
    %c0_i32 = arith.constant 0 : i32
    %2 = arith.cmpi eq, %arg1, %c0_i32 : i32
    %3 = arith.extui %2 : i1 to i32
    %c0_i32_0 = arith.constant 0 : i32
    %4 = arith.cmpi ne, %3, %c0_i32_0 : i32
    scf.if %4 {
      %c0_61 = arith.constant 0 : index
      %c0_62 = arith.constant 0 : index
      %c0_63 = arith.constant 0 : index
      %132 = vector.load %arg3[%c0_61, %c0_62, %c0_63] : memref<1x8x32xf32, #tpu.memory_space<vmem>>, vector<1x8x32xf32>
      %133 = vector.shape_cast %132 : vector<1x8x32xf32> to vector<8x32xf32>
      %c0_64 = arith.constant 0 : index
      %c0_65 = arith.constant 0 : index
      %134 = vector.load %arg17[%c0_64, %c0_65] : memref<8x32xf32, #tpu.memory_space<vmem>>, vector<8x32xf32>
      tpu.vector_store %arg17[%c0_64, %c0_65], %133 {strides = array<i32>} : memref<8x32xf32, #tpu.memory_space<vmem>>, vector<8x32xf32>,
    } else {
    }
    %c0 = arith.constant 0 : index
    %c0_1 = arith.constant 0 : index
    %5 = vector.load %arg17[%c0, %c0_1] : memref<8x32xf32, #tpu.memory_space<vmem>>, vector<8x32xf32>
    %6 = arith.truncf %5 : vector<8x32xf32> to vector<8x32xbf16>
    %c0_2 = arith.constant 0 : index
    %c0_3 = arith.constant 0 : index
    %c0_4 = arith.constant 0 : index
    %7 = vector.load %arg4[%c0_2, %c0_3, %c0_4] : memref<1x32x96xbf16, #tpu.memory_space<vmem>>, vector<1x32x96xbf16>
    %8 = vector.shape_cast %7 : vector<1x32x96xbf16> to vector<32x96xbf16>
    %cst = arith.constant dense<0.000000e+00> : vector<8x96xf32>
    %9 = tpu.matmul %6, %8, %cst {dimension_numbers = #tpu.dot_dimension_numbers<[1], [0], [0], [1], [0, 0, 1, 1], [], []>} : vector<8x32xbf16>, vector<32x96xbf16>, vector<8x96xf32> -> vector<8x96xf32>
    %c0_5 = arith.constant 0 : index
    %c0_6 = arith.constant 0 : index
    %c0_7 = arith.constant 0 : index
    %10 = vector.load %arg5[%c0_5, %c0_6, %c0_7] : memref<1x1x96xf32, #tpu.memory_space<vmem>>, vector<1x1x96xf32>
    %11 = vector.shape_cast %10 : vector<1x1x96xf32> to vector<1x96xf32>
    %12 = vector.broadcast %11 : vector<1x96xf32> to vector<8x96xf32>
    %13 = arith.addf %9, %12 : vector<8x96xf32>
    %14 = vector.extract_strided_slice %13 {offsets = [0, 0], sizes = [8, 32], strides = [1, 1]} : vector<8x96xf32> to vector<8x32xf32>
    %cst_8 = arith.constant 0.353553385 : f32
    %15 = vector.broadcast %cst_8 : f32 to vector<8x32xf32>
    %16 = arith.mulf %14, %15 : vector<8x32xf32>
    %17 = vector.extract_strided_slice %13 {offsets = [0, 32], sizes = [8, 32], strides = [1, 1]} : vector<8x96xf32> to vector<8x32xf32>
    %18 = vector.extract_strided_slice %13 {offsets = [0, 64], sizes = [8, 32], strides = [1, 1]} : vector<8x96xf32> to vector<8x32xf32>
    %19 = vector.shape_cast %16 : vector<8x32xf32> to vector<8x4x8xf32>
    %20 = tpu.transpose %19, [1, 0, 2] : vector<8x4x8xf32> -> vector<4x8x8xf32>
    %21 = arith.truncf %20 : vector<4x8x8xf32> to vector<4x8x8xbf16>
    %22 = vector.shape_cast %17 : vector<8x32xf32> to vector<8x4x8xf32>
    %23 = tpu.transpose %22, [1, 0, 2] : vector<8x4x8xf32> -> vector<4x8x8xf32>
    %24 = arith.truncf %23 : vector<4x8x8xf32> to vector<4x8x8xbf16>
    %25 = vector.shape_cast %18 : vector<8x32xf32> to vector<8x4x8xf32>
    %26 = tpu.transpose %25, [1, 0, 2] : vector<8x4x8xf32> -> vector<4x8x8xf32>
    %27 = arith.truncf %26 : vector<4x8x8xf32> to vector<4x8x8xbf16>
    "tpu.trace_start"() <{level = 10 : i32, message = "htd,hsd->hts"}> : () -> ()
    %cst_9 = arith.constant dense<0.000000e+00> : vector<4x8x8xf32>
    %28 = tpu.matmul %21, %24, %cst_9 {dimension_numbers = #tpu.dot_dimension_numbers<[2], [2], [1], [1], [0, 0, 0, 1, 1, 1], [0], [0]>} : vector<4x8x8xbf16>, vector<4x8x8xbf16>, vector<4x8x8xf32> -> vector<4x8x8xf32>
    "tpu.trace_stop"() : () -> ()
    %29 = tpu.iota {dimensions = array<i32: 2>} : vector<4x8x8xi32>
    %30 = vector.broadcast %1 : i32 to vector<4x8x8xi32>
    %31 = arith.cmpi slt, %29, %30 : vector<4x8x8xi32>
    %cst_10 = arith.constant -1.000000e+06 : f32
    %32 = vector.broadcast %cst_10 : f32 to vector<4x8x8xf32>
    %33 = arith.select %31, %28, %32 : vector<4x8x8xi1>, vector<4x8x8xf32>
    %cst_11 = arith.constant dense<0xFF800000> : vector<4x8xf32>
    %34 = vector.multi_reduction <maximumf>, %33, %cst_11 [2] : vector<4x8x8xf32> to vector<4x8xf32>
    %35 = vector.shape_cast %34 : vector<4x8xf32> to vector<4x8x1xf32>
    %36 = vector.broadcast %35 : vector<4x8x1xf32> to vector<4x8x8xf32>
    %37 = arith.subf %33, %36 : vector<4x8x8xf32>
    %38 = math.exp %37 : vector<4x8x8xf32>
    %cst_12 = arith.constant dense<0.000000e+00> : vector<4x8xf32>
    %39 = vector.multi_reduction <add>, %38, %cst_12 [2] : vector<4x8x8xf32> to vector<4x8xf32>
    %40 = vector.shape_cast %39 : vector<4x8xf32> to vector<4x8x1xf32>
    %41 = tpu.reciprocal %40 {approx = true} : vector<4x8x1xf32> -> vector<4x8x1xf32>
    %42 = vector.broadcast %41 : vector<4x8x1xf32> to vector<4x8x8xf32>
    %43 = arith.mulf %38, %42 : vector<4x8x8xf32>
    %44 = arith.truncf %43 : vector<4x8x8xf32> to vector<4x8x8xbf16>
    "tpu.trace_start"() <{level = 10 : i32, message = "hts,hsd->htd"}> : () -> ()
    %cst_13 = arith.constant dense<0.000000e+00> : vector<4x8x8xf32>
    %45 = tpu.matmul %44, %27, %cst_13 {dimension_numbers = #tpu.dot_dimension_numbers<[2], [1], [1], [2], [0, 0, 0, 1, 1, 2], [0], [0]>} : vector<4x8x8xbf16>, vector<4x8x8xbf16>, vector<4x8x8xf32> -> vector<4x8x8xf32>
    "tpu.trace_stop"() : () -> ()
    %46 = tpu.transpose %45, [1, 0, 2] : vector<4x8x8xf32> -> vector<8x4x8xf32>
    %47 = vector.shape_cast %46 : vector<8x4x8xf32> to vector<8x32xf32>
    %48 = arith.truncf %47 : vector<8x32xf32> to vector<8x32xbf16>
    %c0_14 = arith.constant 0 : index
    %c0_15 = arith.constant 0 : index
    %c0_16 = arith.constant 0 : index
    %49 = vector.load %arg6[%c0_14, %c0_15, %c0_16] : memref<1x32x32xbf16, #tpu.memory_space<vmem>>, vector<1x32x32xbf16>
    %50 = vector.shape_cast %49 : vector<1x32x32xbf16> to vector<32x32xbf16>
    %cst_17 = arith.constant dense<0.000000e+00> : vector<8x32xf32>
    %51 = tpu.matmul %48, %50, %cst_17 {dimension_numbers = #tpu.dot_dimension_numbers<[1], [0], [0], [1], [0, 0, 1, 1], [], []>} : vector<8x32xbf16>, vector<32x32xbf16>, vector<8x32xf32> -> vector<8x32xf32>
    %c0_18 = arith.constant 0 : index
    %c0_19 = arith.constant 0 : index
    %c0_20 = arith.constant 0 : index
    %52 = vector.load %arg7[%c0_18, %c0_19, %c0_20] : memref<1x1x32xf32, #tpu.memory_space<vmem>>, vector<1x1x32xf32>
    %53 = vector.shape_cast %52 : vector<1x1x32xf32> to vector<1x32xf32>
    %54 = vector.broadcast %53 : vector<1x32xf32> to vector<8x32xf32>
    %55 = arith.addf %51, %54 : vector<8x32xf32>
    %56 = arith.addf %5, %55 : vector<8x32xf32>
    %c0_21 = arith.constant 0 : index
    %c0_22 = arith.constant 0 : index
    %c0_23 = arith.constant 0 : index
    %57 = vector.load %arg8[%c0_21, %c0_22, %c0_23] : memref<1x1x32xf32, #tpu.memory_space<vmem>>, vector<1x1x32xf32>
    %58 = vector.shape_cast %57 : vector<1x1x32xf32> to vector<1x32xf32>
    %c0_24 = arith.constant 0 : index
    %c0_25 = arith.constant 0 : index
    %c0_26 = arith.constant 0 : index
    %59 = vector.load %arg9[%c0_24, %c0_25, %c0_26] : memref<1x1x32xf32, #tpu.memory_space<vmem>>, vector<1x1x32xf32>
    %60 = vector.shape_cast %59 : vector<1x1x32xf32> to vector<1x32xf32>
    %cst_27 = arith.constant dense<0.000000e+00> : vector<8xf32>
    %61 = vector.multi_reduction <add>, %56, %cst_27 [1] : vector<8x32xf32> to vector<8xf32>
    %62 = vector.shape_cast %61 : vector<8xf32> to vector<8x1xf32>
    %cst_28 = arith.constant 3.200000e+01 : f32
    %63 = vector.broadcast %cst_28 : f32 to vector<8x1xf32>
    %64 = arith.divf %62, %63 : vector<8x1xf32>
    %65 = vector.broadcast %64 : vector<8x1xf32> to vector<8x32xf32>
    %66 = arith.subf %56, %65 : vector<8x32xf32>
    %67 = arith.mulf %66, %66 : vector<8x32xf32>
    %cst_29 = arith.constant dense<0.000000e+00> : vector<8xf32>
    %68 = vector.multi_reduction <add>, %67, %cst_29 [1] : vector<8x32xf32> to vector<8xf32>
    %69 = vector.shape_cast %68 : vector<8xf32> to vector<8x1xf32>
    %cst_30 = arith.constant 3.200000e+01 : f32
    %70 = vector.broadcast %cst_30 : f32 to vector<8x1xf32>
    %71 = arith.divf %69, %70 : vector<8x1xf32>
    %72 = vector.broadcast %64 : vector<8x1xf32> to vector<8x32xf32>
    %73 = arith.subf %56, %72 : vector<8x32xf32>
    %cst_31 = arith.constant 9.99999974E-6 : f32
    %74 = vector.broadcast %cst_31 : f32 to vector<8x1xf32>
    %75 = arith.addf %71, %74 : vector<8x1xf32>
    %76 = math.rsqrt %75 : vector<8x1xf32>
    %77 = vector.broadcast %76 : vector<8x1xf32> to vector<8x32xf32>
    %78 = arith.mulf %73, %77 : vector<8x32xf32>
    %79 = vector.broadcast %58 : vector<1x32xf32> to vector<8x32xf32>
    %80 = arith.mulf %78, %79 : vector<8x32xf32>
    %81 = vector.broadcast %60 : vector<1x32xf32> to vector<8x32xf32>
    %82 = arith.addf %80, %81 : vector<8x32xf32>
    %83 = arith.truncf %82 : vector<8x32xf32> to vector<8x32xbf16>
    %c0_32 = arith.constant 0 : index
    %c0_33 = arith.constant 0 : index
    %c0_34 = arith.constant 0 : index
    %84 = vector.load %arg10[%c0_32, %c0_33, %c0_34] : memref<1x32x64xbf16, #tpu.memory_space<vmem>>, vector<1x32x64xbf16>
    %85 = vector.shape_cast %84 : vector<1x32x64xbf16> to vector<32x64xbf16>
    %cst_35 = arith.constant dense<0.000000e+00> : vector<8x64xf32>
    %86 = tpu.matmul %83, %85, %cst_35 {dimension_numbers = #tpu.dot_dimension_numbers<[1], [0], [0], [1], [0, 0, 1, 1], [], []>} : vector<8x32xbf16>, vector<32x64xbf16>, vector<8x64xf32> -> vector<8x64xf32>
    %c0_36 = arith.constant 0 : index
    %c0_37 = arith.constant 0 : index
    %c0_38 = arith.constant 0 : index
    %87 = vector.load %arg11[%c0_36, %c0_37, %c0_38] : memref<1x1x64xf32, #tpu.memory_space<vmem>>, vector<1x1x64xf32>
    %88 = vector.shape_cast %87 : vector<1x1x64xf32> to vector<1x64xf32>
    %89 = vector.broadcast %88 : vector<1x64xf32> to vector<8x64xf32>
    %90 = arith.addf %86, %89 : vector<8x64xf32>
    %cst_39 = arith.constant 0.000000e+00 : f32
    %91 = vector.broadcast %cst_39 : f32 to vector<8x64xf32>
    %92 = arith.maximumf %90, %91 : vector<8x64xf32>
    %93 = arith.truncf %92 : vector<8x64xf32> to vector<8x64xbf16>
    %c0_40 = arith.constant 0 : index
    %c0_41 = arith.constant 0 : index
    %c0_42 = arith.constant 0 : index
    %94 = vector.load %arg12[%c0_40, %c0_41, %c0_42] : memref<1x64x32xbf16, #tpu.memory_space<vmem>>, vector<1x64x32xbf16>
    %95 = vector.shape_cast %94 : vector<1x64x32xbf16> to vector<64x32xbf16>
    %cst_43 = arith.constant dense<0.000000e+00> : vector<8x32xf32>
    %96 = tpu.matmul %93, %95, %cst_43 {dimension_numbers = #tpu.dot_dimension_numbers<[1], [0], [0], [1], [0, 0, 1, 1], [], []>} : vector<8x64xbf16>, vector<64x32xbf16>, vector<8x32xf32> -> vector<8x32xf32>
    %c0_44 = arith.constant 0 : index
    %c0_45 = arith.constant 0 : index
    %c0_46 = arith.constant 0 : index
    %97 = vector.load %arg13[%c0_44, %c0_45, %c0_46] : memref<1x1x32xf32, #tpu.memory_space<vmem>>, vector<1x1x32xf32>
    %98 = vector.shape_cast %97 : vector<1x1x32xf32> to vector<1x32xf32>
    %99 = vector.broadcast %98 : vector<1x32xf32> to vector<8x32xf32>
    %100 = arith.addf %96, %99 : vector<8x32xf32>
    %101 = arith.addf %82, %100 : vector<8x32xf32>
    %c0_47 = arith.constant 0 : index
    %c0_48 = arith.constant 0 : index
    %c0_49 = arith.constant 0 : index
    %102 = vector.load %arg14[%c0_47, %c0_48, %c0_49] : memref<1x1x32xf32, #tpu.memory_space<vmem>>, vector<1x1x32xf32>
    %103 = vector.shape_cast %102 : vector<1x1x32xf32> to vector<1x32xf32>
    %c0_50 = arith.constant 0 : index
    %c0_51 = arith.constant 0 : index
    %c0_52 = arith.constant 0 : index
    %104 = vector.load %arg15[%c0_50, %c0_51, %c0_52] : memref<1x1x32xf32, #tpu.memory_space<vmem>>, vector<1x1x32xf32>
    %105 = vector.shape_cast %104 : vector<1x1x32xf32> to vector<1x32xf32>
    %cst_53 = arith.constant dense<0.000000e+00> : vector<8xf32>
    %106 = vector.multi_reduction <add>, %101, %cst_53 [1] : vector<8x32xf32> to vector<8xf32>
    %107 = vector.shape_cast %106 : vector<8xf32> to vector<8x1xf32>
    %cst_54 = arith.constant 3.200000e+01 : f32
    %108 = vector.broadcast %cst_54 : f32 to vector<8x1xf32>
    %109 = arith.divf %107, %108 : vector<8x1xf32>
    %110 = vector.broadcast %109 : vector<8x1xf32> to vector<8x32xf32>
    %111 = arith.subf %101, %110 : vector<8x32xf32>
    %112 = arith.mulf %111, %111 : vector<8x32xf32>
    %cst_55 = arith.constant dense<0.000000e+00> : vector<8xf32>
    %113 = vector.multi_reduction <add>, %112, %cst_55 [1] : vector<8x32xf32> to vector<8xf32>
    %114 = vector.shape_cast %113 : vector<8xf32> to vector<8x1xf32>
    %cst_56 = arith.constant 3.200000e+01 : f32
    %115 = vector.broadcast %cst_56 : f32 to vector<8x1xf32>
    %116 = arith.divf %114, %115 : vector<8x1xf32>
    %117 = vector.broadcast %109 : vector<8x1xf32> to vector<8x32xf32>
    %118 = arith.subf %101, %117 : vector<8x32xf32>
    %cst_57 = arith.constant 9.99999974E-6 : f32
    %119 = vector.broadcast %cst_57 : f32 to vector<8x1xf32>
    %120 = arith.addf %116, %119 : vector<8x1xf32>
    %121 = math.rsqrt %120 : vector<8x1xf32>
    %122 = vector.broadcast %121 : vector<8x1xf32> to vector<8x32xf32>
    %123 = arith.mulf %118, %122 : vector<8x32xf32>
    %124 = vector.broadcast %103 : vector<1x32xf32> to vector<8x32xf32>
    %125 = arith.mulf %123, %124 : vector<8x32xf32>
    %126 = vector.broadcast %105 : vector<1x32xf32> to vector<8x32xf32>
    %127 = arith.addf %125, %126 : vector<8x32xf32>
    %c0_58 = arith.constant 0 : index
    %c0_59 = arith.constant 0 : index
    %128 = vector.load %arg17[%c0_58, %c0_59] : memref<8x32xf32, #tpu.memory_space<vmem>>, vector<8x32xf32>
    tpu.vector_store %arg17[%c0_58, %c0_59], %127 {strides = array<i32>} : memref<8x32xf32, #tpu.memory_space<vmem>>, vector<8x32xf32>,
    %c1_i32 = arith.constant 1 : i32
    %129 = arith.cmpi eq, %arg1, %c1_i32 : i32
    %130 = arith.extui %129 : i1 to i32
    %c0_i32_60 = arith.constant 0 : i32
    %131 = arith.cmpi ne, %130, %c0_i32_60 : i32
    scf.if %131 {
      %c0_61 = arith.constant 0 : index
      %c0_62 = arith.constant 0 : index
      %c0_63 = arith.constant 0 : index
      %132 = vector.load %arg16[%c0_61, %c0_62, %c0_63] : memref<1x8x32xf32, #tpu.memory_space<vmem>>, vector<1x8x32xf32>
      %133 = vector.shape_cast %132 : vector<1x8x32xf32> to vector<8x32xf32>
      %134 = vector.shape_cast %127 : vector<8x32xf32> to vector<1x8x32xf32>
      tpu.vector_store %arg16[%c0_61, %c0_62, %c0_63], %134 {strides = array<i32>} : memref<1x8x32xf32, #tpu.memory_space<vmem>>, vector<1x8x32xf32>,
    } else {
    }
    return
  }
  func.func @transform_0(%arg0: i32, %arg1: i32, %arg2: memref<2xi32, #tpu.memory_space<smem>>) -> (i32, i32, i32) {
    %c0_i32 = arith.constant 0 : i32
    %c0_i32_0 = arith.constant 0 : i32
    %c0_i32_1 = arith.constant 0 : i32
    return %arg0, %c0_i32, %c0_i32_0 : i32, i32, i32
  }
  func.func @transform_1(%arg0: i32, %arg1: i32, %arg2: memref<2xi32, #tpu.memory_space<smem>>) -> (i32, i32, i32) {
    %c0_i32 = arith.constant 0 : i32
    %c0_i32_0 = arith.constant 0 : i32
    %c0_i32_1 = arith.constant 0 : i32
    return %arg1, %c0_i32, %c0_i32_0 : i32, i32, i32
  }
  func.func @transform_2(%arg0: i32, %arg1: i32, %arg2: memref<2xi32, #tpu.memory_space<smem>>) -> (i32, i32, i32) {
    %c0_i32 = arith.constant 0 : i32
    %c0_i32_0 = arith.constant 0 : i32
    %c0_i32_1 = arith.constant 0 : i32
    return %arg1, %c0_i32, %c0_i32_0 : i32, i32, i32
  }
  func.func @transform_3(%arg0: i32, %arg1: i32, %arg2: memref<2xi32, #tpu.memory_space<smem>>) -> (i32, i32, i32) {
    %c0_i32 = arith.constant 0 : i32
    %c0_i32_0 = arith.constant 0 : i32
    %c0_i32_1 = arith.constant 0 : i32
    return %arg1, %c0_i32, %c0_i32_0 : i32, i32, i32
  }
  func.func @transform_4(%arg0: i32, %arg1: i32, %arg2: memref<2xi32, #tpu.memory_space<smem>>) -> (i32, i32, i32) {
    %c0_i32 = arith.constant 0 : i32
    %c0_i32_0 = arith.constant 0 : i32
    %c0_i32_1 = arith.constant 0 : i32
    return %arg1, %c0_i32, %c0_i32_0 : i32, i32, i32
  }
  func.func @transform_5(%arg0: i32, %arg1: i32, %arg2: memref<2xi32, #tpu.memory_space<smem>>) -> (i32, i32, i32) {
    %c0_i32 = arith.constant 0 : i32
    %c0_i32_0 = arith.constant 0 : i32
    %c0_i32_1 = arith.constant 0 : i32
    return %arg1, %c0_i32, %c0_i32_0 : i32, i32, i32
  }
  func.func @transform_6(%arg0: i32, %arg1: i32, %arg2: memref<2xi32, #tpu.memory_space<smem>>) -> (i32, i32, i32) {
    %c0_i32 = arith.constant 0 : i32
    %c0_i32_0 = arith.constant 0 : i32
    %c0_i32_1 = arith.constant 0 : i32
    return %arg1, %c0_i32, %c0_i32_0 : i32, i32, i32
  }
  func.func @transform_7(%arg0: i32, %arg1: i32, %arg2: memref<2xi32, #tpu.memory_space<smem>>) -> (i32, i32, i32) {
    %c0_i32 = arith.constant 0 : i32
    %c0_i32_0 = arith.constant 0 : i32
    %c0_i32_1 = arith.constant 0 : i32
    return %arg1, %c0_i32, %c0_i32_0 : i32, i32, i32
  }
  func.func @transform_8(%arg0: i32, %arg1: i32, %arg2: memref<2xi32, #tpu.memory_space<smem>>) -> (i32, i32, i32) {
    %c0_i32 = arith.constant 0 : i32
    %c0_i32_0 = arith.constant 0 : i32
    %c0_i32_1 = arith.constant 0 : i32
    return %arg1, %c0_i32, %c0_i32_0 : i32, i32, i32
  }
  func.func @transform_9(%arg0: i32, %arg1: i32, %arg2: memref<2xi32, #tpu.memory_space<smem>>) -> (i32, i32, i32) {
    %c0_i32 = arith.constant 0 : i32
    %c0_i32_0 = arith.constant 0 : i32
    %c0_i32_1 = arith.constant 0 : i32
    return %arg1, %c0_i32, %c0_i32_0 : i32, i32, i32
  }
  func.func @transform_10(%arg0: i32, %arg1: i32, %arg2: memref<2xi32, #tpu.memory_space<smem>>) -> (i32, i32, i32) {
    %c0_i32 = arith.constant 0 : i32
    %c0_i32_0 = arith.constant 0 : i32
    %c0_i32_1 = arith.constant 0 : i32
    return %arg1, %c0_i32, %c0_i32_0 : i32, i32, i32
  }
  func.func @transform_11(%arg0: i32, %arg1: i32, %arg2: memref<2xi32, #tpu.memory_space<smem>>) -> (i32, i32, i32) {
    %c0_i32 = arith.constant 0 : i32
    %c0_i32_0 = arith.constant 0 : i32
    %c0_i32_1 = arith.constant 0 : i32
    return %arg1, %c0_i32, %c0_i32_0 : i32, i32, i32
  }
  func.func @transform_12(%arg0: i32, %arg1: i32, %arg2: memref<2xi32, #tpu.memory_space<smem>>) -> (i32, i32, i32) {
    %c0_i32 = arith.constant 0 : i32
    %c0_i32_0 = arith.constant 0 : i32
    %c0_i32_1 = arith.constant 0 : i32
    return %arg1, %c0_i32, %c0_i32_0 : i32, i32, i32
  }
  func.func @transform_13(%arg0: i32, %arg1: i32, %arg2: memref<2xi32, #tpu.memory_space<smem>>) -> (i32, i32, i32) {
    %c0_i32 = arith.constant 0 : i32
    %c0_i32_0 = arith.constant 0 : i32
    %c0_i32_1 = arith.constant 0 : i32
    return %arg0, %c0_i32, %c0_i32_0 : i32, i32, i32
  }
}

</mosaic_0001>

<llo_original>
// kernel: tpu_custom_call.1
$region0: #{tpu_custom_call.1}
  #allocation0 [shape = 'u32[]', space=smem, size = 0x4, offset = 0x4, fixed_abs, tag = 'smem constant byte address 0x4 - core index']
  #allocation1 [shape = 'u32[144,128]{1,0:T(1,128)}', space=vmem, size = 0x12000, scoped, tag = 'internal scratch']
  #allocation2 [shape = 'f32[8,32]{1,0:T(8,128)}', space=vmem, size = 0x1000, scoped, tag = 'scratch operand']
  #allocation3 [shape = 's32[1]{0}', space=sflag, size = 0x4, scoped, tag = 'scoped memory for tpu_custom_call.1']
  #allocation4 [shape = 'u8[512]{0}', space=smem, size = 0x200, scoped, tag = 'prefetched SMEM operand 0']
  %s0 = inlined_call_operand.hbm [shape: s32[2], index: 0, kind: input, shape index: {}]
  %s1 = inlined_call_operand.hbm [shape: f32[2,8,32], index: 1, kind: input, shape index: {}]
  %s2 = inlined_call_operand.vmem [shape: bf16[2,32,96], index: 2, kind: input, shape index: {}]
  %s3 = inlined_call_operand.vmem [shape: f32[2,1,96], index: 3, kind: input, shape index: {}]
  %s4 = inlined_call_operand.vmem [shape: bf16[2,32,32], index: 4, kind: input, shape index: {}]
  %s5 = inlined_call_operand.vmem [shape: f32[2,1,32], index: 5, kind: input, shape index: {}]
  %s6 = inlined_call_operand.vmem [shape: f32[2,1,32], index: 6, kind: input, shape index: {}]
  %s7 = inlined_call_operand.vmem [shape: f32[2,1,32], index: 7, kind: input, shape index: {}]
  %s8 = inlined_call_operand.vmem [shape: bf16[2,32,64], index: 8, kind: input, shape index: {}]
  %s9 = inlined_call_operand.vmem [shape: f32[2,1,64], index: 9, kind: input, shape index: {}]
  %s10 = inlined_call_operand.vmem [shape: bf16[2,64,32], index: 10, kind: input, shape index: {}]
  %s11 = inlined_call_operand.vmem [shape: f32[2,1,32], index: 11, kind: input, shape index: {}]
  %s12 = inlined_call_operand.vmem [shape: f32[2,1,32], index: 12, kind: input, shape index: {}]
  %s13 = inlined_call_operand.vmem [shape: f32[2,1,32], index: 13, kind: input, shape index: {}]
  %s14 = inlined_call_operand.hbm [shape: f32[2,8,32], index: 14, kind: output, shape index: {}]
  %s15 = sld [smem:[#allocation0]]
  $region97: #{tpu_custom_call.1} parent=0
    _
  %s17 = ssub.s32 1, %s15
  %s18 = scalar_select 0, %s17, %s15
  %20 = dma.hbm_to_smem %s0, 16, [#allocation4], [#allocation3]
  %21 = dma.done [#allocation3], 16
  %22 = sfence
  $region1: #{tpu_custom_call.1} parent=0
    #allocation5 [shape = 'u8[8192]{0}', space=vmem, size = 0x2000, scoped, tag = 'input window, operand 1']
    #allocation6 [shape = 's32[2]{0}', space=sflag, size = 0x8, scoped, tag = 'scoped memory for tpu_custom_call.1']
    #allocation7 [shape = 's32[2]{0}', space=sflag, size = 0x8, scoped, tag = 'scoped memory for tpu_custom_call.1']
    #allocation8 [shape = 'u8[8192]{0}', space=vmem, size = 0x2000, scoped, tag = 'output window, operand 0']
    %23 = vsyncpa [#allocation6], 0
    %s24 = scalar_lea.sflag [#allocation6], 1
    %25 = vsyncpa %s24, 0
    %26 = vsyncpa [#allocation7], 0
    %s27 = scalar_lea.sflag [#allocation7], 1
    %28 = vsyncpa %s27, 0
    loop: start=0, step=1, limit=6
    $region2: #{tpu_custom_call.1} parent=1 // loop_pre_header
      _
    $region3: #{tpu_custom_call.1} parent=1 // loop_header
      %s30 = sphi 0, %s34
      %p31 = scmp.ge.s32.totalorder %s30, 6
      %s37 = sphi 0, %s49
      %s38 = sphi 0, %s45
      %s39 = sphi 0, %s37
      %s40 = sphi 0, %s38
      %s41 = sphi 0, %s39
      %s42 = sphi 0, %s40
      %s52 = sphi 0, %s54
      %s55 = sphi 0, %s52
      %s56 = sphi 0, %s55
      %s72 = sphi 0, %s56
      %s78 = sphi 0, %s80
      %s81 = sphi 0, %s78
      %s82 = sphi 0, %s81
      %s98 = sphi 0, %s82
      %s104 = sphi 0, %s106
      %s107 = sphi 0, %s104
      %s108 = sphi 0, %s107
      %s124 = sphi 0, %s108
      %s130 = sphi 0, %s132
      %s133 = sphi 0, %s130
      %s134 = sphi 0, %s133
      %s150 = sphi 0, %s134
      %s156 = sphi 0, %s158
      %s159 = sphi 0, %s156
      %s160 = sphi 0, %s159
      %s176 = sphi 0, %s160
      %s182 = sphi 0, %s184
      %s185 = sphi 0, %s182
      %s186 = sphi 0, %s185
      %s202 = sphi 0, %s186
      %s208 = sphi 0, %s210
      %s211 = sphi 0, %s208
      %s212 = sphi 0, %s211
      %s228 = sphi 0, %s212
      %s234 = sphi 0, %s236
      %s237 = sphi 0, %s234
      %s238 = sphi 0, %s237
      %s254 = sphi 0, %s238
      %s260 = sphi 0, %s262
      %s263 = sphi 0, %s260
      %s264 = sphi 0, %s263
      %s280 = sphi 0, %s264
      %s286 = sphi 0, %s288
      %s289 = sphi 0, %s286
      %s290 = sphi 0, %s289
      %s306 = sphi 0, %s290
      %s312 = sphi 0, %s314
      %s315 = sphi 0, %s312
      %s316 = sphi 0, %s315
      %s332 = sphi 0, %s316
      %s338 = sphi 0, %s340
      %s341 = sphi 0, %s338
      %s342 = sphi 0, %s341
      %s358 = sphi 0, %s342
      %s364 = sphi 0, %s366
      %s367 = sphi 0, %s364
      %s368 = sphi 0, %s367
      %s384 = sphi 0, %s368
      %s390 = sphi 0, %s392
      %s393 = sphi 0, %s390
      %s394 = sphi 0, %s393
      %s410 = sphi 0, %s394
    $region4: #{tpu_custom_call.1} parent=1 // loop_header_branch
      %33 = sbr.rel (%p31) target = $region8
    $region5: #{tpu_custom_call.1} parent=1 // loop_body
      %s35 = ssub.s32 %s30, 1
      %s36 = ssub.s32 %s30, 2
      %s43 = sadd.s32 1, %s38
      %p44 = scmp.ge.s32.totalorder %s43, 2
      %s45 = scalar_select %p44, 0, %s43
      %s46 = sadd.s32 1, %s37
      %s47 = scalar_select %p44, %s46, %s37
      %p48 = scmp.ge.s32.totalorder %s47, 2
      %s49 = scalar_select %p48, 0, %s47
      %s50 = ssub.s32 %s37, %s49
      %p51 = scmp.eq.s32.totalorder %s50, 0
      %s53 = sadd.s32 %s52, 1
      %s54 = scalar_select %p51, %s52, %s53
      %p57 = pneg %p51
      %p58 = scmp.eq.s32.totalorder %s30, 3
      %p59 = por %p57, %p58
      %p60 = scmp.ne.s32.totalorder %s52, %s55
      %p61 = scmp.eq.s32.totalorder %s30, 0
      %p62 = por %p60, %p61
      %p63 = scmp.ne.s32.totalorder %s52, %s55
      %p64 = scmp.eq.s32.totalorder %s35, 3
      %p65 = por %p63, %p64
      %p66 = scmp.ne.s32.totalorder %s55, %s56
      %p67 = scmp.eq.s32.totalorder %s35, 0
      %p68 = por %p66, %p67
      %p69 = scmp.ne.s32.totalorder %s55, %s56
      %p70 = scmp.eq.s32.totalorder %s36, 3
      %p71 = por %p69, %p70
      %p73 = scmp.ne.s32.totalorder %s56, %s72
      %p74 = scmp.eq.s32.totalorder %s36, 0
      %p75 = por %p73, %p74
      %s76 = ssub.s32 %s38, %s45
      %p77 = scmp.eq.s32.totalorder %s76, 0
      %s79 = sadd.s32 %s78, 1
      %s80 = scalar_select %p77, %s78, %s79
      %p83 = pneg %p77
      %p84 = scmp.eq.s32.totalorder %s30, 3
      %p85 = por %p83, %p84
      %p86 = scmp.ne.s32.totalorder %s78, %s81
      %p87 = scmp.eq.s32.totalorder %s30, 0
      %p88 = por %p86, %p87
      %p89 = scmp.ne.s32.totalorder %s78, %s81
      %p90 = scmp.eq.s32.totalorder %s35, 3
      %p91 = por %p89, %p90
      %p92 = scmp.ne.s32.totalorder %s81, %s82
      %p93 = scmp.eq.s32.totalorder %s35, 0
      %p94 = por %p92, %p93
      %p95 = scmp.ne.s32.totalorder %s81, %s82
      %p96 = scmp.eq.s32.totalorder %s36, 3
      %p97 = por %p95, %p96
      %p99 = scmp.ne.s32.totalorder %s82, %s98
      %p100 = scmp.eq.s32.totalorder %s36, 0
      %p101 = por %p99, %p100
      %s102 = ssub.s32 %s38, %s45
      %p103 = scmp.eq.s32.totalorder %s102, 0
      %s105 = sadd.s32 %s104, 1
      %s106 = scalar_select %p103, %s104, %s105
      %p109 = pneg %p103
      %p110 = scmp.eq.s32.totalorder %s30, 3
      %p111 = por %p109, %p110
      %p112 = scmp.ne.s32.totalorder %s104, %s107
      %p113 = scmp.eq.s32.totalorder %s30, 0
      %p114 = por %p112, %p113
      %p115 = scmp.ne.s32.totalorder %s104, %s107
      %p116 = scmp.eq.s32.totalorder %s35, 3
      %p117 = por %p115, %p116
      %p118 = scmp.ne.s32.totalorder %s107, %s108
      %p119 = scmp.eq.s32.totalorder %s35, 0
      %p120 = por %p118, %p119
      %p121 = scmp.ne.s32.totalorder %s107, %s108
      %p122 = scmp.eq.s32.totalorder %s36, 3
      %p123 = por %p121, %p122
      %p125 = scmp.ne.s32.totalorder %s108, %s124
      %p126 = scmp.eq.s32.totalorder %s36, 0
      %p127 = por %p125, %p126
      %s128 = ssub.s32 %s38, %s45
      %p129 = scmp.eq.s32.totalorder %s128, 0
      %s131 = sadd.s32 %s130, 1
      %s132 = scalar_select %p129, %s130, %s131
      %p135 = pneg %p129
      %p136 = scmp.eq.s32.totalorder %s30, 3
      %p137 = por %p135, %p136
      %p138 = scmp.ne.s32.totalorder %s130, %s133
      %p139 = scmp.eq.s32.totalorder %s30, 0
      %p140 = por %p138, %p139
      %p141 = scmp.ne.s32.totalorder %s130, %s133
      %p142 = scmp.eq.s32.totalorder %s35, 3
      %p143 = por %p141, %p142
      %p144 = scmp.ne.s32.totalorder %s133, %s134
      %p145 = scmp.eq.s32.totalorder %s35, 0
      %p146 = por %p144, %p145
      %p147 = scmp.ne.s32.totalorder %s133, %s134
      %p148 = scmp.eq.s32.totalorder %s36, 3
      %p149 = por %p147, %p148
      %p151 = scmp.ne.s32.totalorder %s134, %s150
      %p152 = scmp.eq.s32.totalorder %s36, 0
      %p153 = por %p151, %p152
      %s154 = ssub.s32 %s38, %s45
      %p155 = scmp.eq.s32.totalorder %s154, 0
      %s157 = sadd.s32 %s156, 1
      %s158 = scalar_select %p155, %s156, %s157
      %p161 = pneg %p155
      %p162 = scmp.eq.s32.totalorder %s30, 3
      %p163 = por %p161, %p162
      %p164 = scmp.ne.s32.totalorder %s156, %s159
      %p165 = scmp.eq.s32.totalorder %s30, 0
      %p166 = por %p164, %p165
      %p167 = scmp.ne.s32.totalorder %s156, %s159
      %p168 = scmp.eq.s32.totalorder %s35, 3
      %p169 = por %p167, %p168
      %p170 = scmp.ne.s32.totalorder %s159, %s160
      %p171 = scmp.eq.s32.totalorder %s35, 0
      %p172 = por %p170, %p171
      %p173 = scmp.ne.s32.totalorder %s159, %s160
      %p174 = scmp.eq.s32.totalorder %s36, 3
      %p175 = por %p173, %p174
      %p177 = scmp.ne.s32.totalorder %s160, %s176
      %p178 = scmp.eq.s32.totalorder %s36, 0
      %p179 = por %p177, %p178
      %s180 = ssub.s32 %s38, %s45
      %p181 = scmp.eq.s32.totalorder %s180, 0
      %s183 = sadd.s32 %s182, 1
      %s184 = scalar_select %p181, %s182, %s183
      %p187 = pneg %p181
      %p188 = scmp.eq.s32.totalorder %s30, 3
      %p189 = por %p187, %p188
      %p190 = scmp.ne.s32.totalorder %s182, %s185
      %p191 = scmp.eq.s32.totalorder %s30, 0
      %p192 = por %p190, %p191
      %p193 = scmp.ne.s32.totalorder %s182, %s185
      %p194 = scmp.eq.s32.totalorder %s35, 3
      %p195 = por %p193, %p194
      %p196 = scmp.ne.s32.totalorder %s185, %s186
      %p197 = scmp.eq.s32.totalorder %s35, 0
      %p198 = por %p196, %p197
      %p199 = scmp.ne.s32.totalorder %s185, %s186
      %p200 = scmp.eq.s32.totalorder %s36, 3
      %p201 = por %p199, %p200
      %p203 = scmp.ne.s32.totalorder %s186, %s202
      %p204 = scmp.eq.s32.totalorder %s36, 0
      %p205 = por %p203, %p204
      %s206 = ssub.s32 %s38, %s45
      %p207 = scmp.eq.s32.totalorder %s206, 0
      %s209 = sadd.s32 %s208, 1
      %s210 = scalar_select %p207, %s208, %s209
      %p213 = pneg %p207
      %p214 = scmp.eq.s32.totalorder %s30, 3
      %p215 = por %p213, %p214
      %p216 = scmp.ne.s32.totalorder %s208, %s211
      %p217 = scmp.eq.s32.totalorder %s30, 0
      %p218 = por %p216, %p217
      %p219 = scmp.ne.s32.totalorder %s208, %s211
      %p220 = scmp.eq.s32.totalorder %s35, 3
      %p221 = por %p219, %p220
      %p222 = scmp.ne.s32.totalorder %s211, %s212
      %p223 = scmp.eq.s32.totalorder %s35, 0
      %p224 = por %p222, %p223
      %p225 = scmp.ne.s32.totalorder %s211, %s212
      %p226 = scmp.eq.s32.totalorder %s36, 3
      %p227 = por %p225, %p226
      %p229 = scmp.ne.s32.totalorder %s212, %s228
      %p230 = scmp.eq.s32.totalorder %s36, 0
      %p231 = por %p229, %p230
      %s232 = ssub.s32 %s38, %s45
      %p233 = scmp.eq.s32.totalorder %s232, 0
      %s235 = sadd.s32 %s234, 1
      %s236 = scalar_select %p233, %s234, %s235
      %p239 = pneg %p233
      %p240 = scmp.eq.s32.totalorder %s30, 3
      %p241 = por %p239, %p240
      %p242 = scmp.ne.s32.totalorder %s234, %s237
      %p243 = scmp.eq.s32.totalorder %s30, 0
      %p244 = por %p242, %p243
      %p245 = scmp.ne.s32.totalorder %s234, %s237
      %p246 = scmp.eq.s32.totalorder %s35, 3
      %p247 = por %p245, %p246
      %p248 = scmp.ne.s32.totalorder %s237, %s238
      %p249 = scmp.eq.s32.totalorder %s35, 0
      %p250 = por %p248, %p249
      %p251 = scmp.ne.s32.totalorder %s237, %s238
      %p252 = scmp.eq.s32.totalorder %s36, 3
      %p253 = por %p251, %p252
      %p255 = scmp.ne.s32.totalorder %s238, %s254
      %p256 = scmp.eq.s32.totalorder %s36, 0
      %p257 = por %p255, %p256
      %s258 = ssub.s32 %s38, %s45
      %p259 = scmp.eq.s32.totalorder %s258, 0
      %s261 = sadd.s32 %s260, 1
      %s262 = scalar_select %p259, %s260, %s261
      %p265 = pneg %p259
      %p266 = scmp.eq.s32.totalorder %s30, 3
      %p267 = por %p265, %p266
      %p268 = scmp.ne.s32.totalorder %s260, %s263
      %p269 = scmp.eq.s32.totalorder %s30, 0
      %p270 = por %p268, %p269
      %p271 = scmp.ne.s32.totalorder %s260, %s263
      %p272 = scmp.eq.s32.totalorder %s35, 3
      %p273 = por %p271, %p272
      %p274 = scmp.ne.s32.totalorder %s263, %s264
      %p275 = scmp.eq.s32.totalorder %s35, 0
      %p276 = por %p274, %p275
      %p277 = scmp.ne.s32.totalorder %s263, %s264
      %p278 = scmp.eq.s32.totalorder %s36, 3
      %p279 = por %p277, %p278
      %p281 = scmp.ne.s32.totalorder %s264, %s280
      %p282 = scmp.eq.s32.totalorder %s36, 0
      %p283 = por %p281, %p282
      %s284 = ssub.s32 %s38, %s45
      %p285 = scmp.eq.s32.totalorder %s284, 0
      %s287 = sadd.s32 %s286, 1
      %s288 = scalar_select %p285, %s286, %s287
      %p291 = pneg %p285
      %p292 = scmp.eq.s32.totalorder %s30, 3
      %p293 = por %p291, %p292
      %p294 = scmp.ne.s32.totalorder %s286, %s289
      %p295 = scmp.eq.s32.totalorder %s30, 0
      %p296 = por %p294, %p295
      %p297 = scmp.ne.s32.totalorder %s286, %s289
      %p298 = scmp.eq.s32.totalorder %s35, 3
      %p299 = por %p297, %p298
      %p300 = scmp.ne.s32.totalorder %s289, %s290
      %p301 = scmp.eq.s32.totalorder %s35, 0
      %p302 = por %p300, %p301
      %p303 = scmp.ne.s32.totalorder %s289, %s290
      %p304 = scmp.eq.s32.totalorder %s36, 3
      %p305 = por %p303, %p304
      %p307 = scmp.ne.s32.totalorder %s290, %s306
      %p308 = scmp.eq.s32.totalorder %s36, 0
      %p309 = por %p307, %p308
      %s310 = ssub.s32 %s38, %s45
      %p311 = scmp.eq.s32.totalorder %s310, 0
      %s313 = sadd.s32 %s312, 1
      %s314 = scalar_select %p311, %s312, %s313
      %p317 = pneg %p311
      %p318 = scmp.eq.s32.totalorder %s30, 3
      %p319 = por %p317, %p318
      %p320 = scmp.ne.s32.totalorder %s312, %s315
      %p321 = scmp.eq.s32.totalorder %s30, 0
      %p322 = por %p320, %p321
      %p323 = scmp.ne.s32.totalorder %s312, %s315
      %p324 = scmp.eq.s32.totalorder %s35, 3
      %p325 = por %p323, %p324
      %p326 = scmp.ne.s32.totalorder %s315, %s316
      %p327 = scmp.eq.s32.totalorder %s35, 0
      %p328 = por %p326, %p327
      %p329 = scmp.ne.s32.totalorder %s315, %s316
      %p330 = scmp.eq.s32.totalorder %s36, 3
      %p331 = por %p329, %p330
      %p333 = scmp.ne.s32.totalorder %s316, %s332
      %p334 = scmp.eq.s32.totalorder %s36, 0
      %p335 = por %p333, %p334
      %s336 = ssub.s32 %s38, %s45
      %p337 = scmp.eq.s32.totalorder %s336, 0
      %s339 = sadd.s32 %s338, 1
      %s340 = scalar_select %p337, %s338, %s339
      %p343 = pneg %p337
      %p344 = scmp.eq.s32.totalorder %s30, 3
      %p345 = por %p343, %p344
      %p346 = scmp.ne.s32.totalorder %s338, %s341
      %p347 = scmp.eq.s32.totalorder %s30, 0
      %p348 = por %p346, %p347
      %p349 = scmp.ne.s32.totalorder %s338, %s341
      %p350 = scmp.eq.s32.totalorder %s35, 3
      %p351 = por %p349, %p350
      %p352 = scmp.ne.s32.totalorder %s341, %s342
      %p353 = scmp.eq.s32.totalorder %s35, 0
      %p354 = por %p352, %p353
      %p355 = scmp.ne.s32.totalorder %s341, %s342
      %p356 = scmp.eq.s32.totalorder %s36, 3
      %p357 = por %p355, %p356
      %p359 = scmp.ne.s32.totalorder %s342, %s358
      %p360 = scmp.eq.s32.totalorder %s36, 0
      %p361 = por %p359, %p360
      %s362 = ssub.s32 %s38, %s45
      %p363 = scmp.eq.s32.totalorder %s362, 0
      %s365 = sadd.s32 %s364, 1
      %s366 = scalar_select %p363, %s364, %s365
      %p369 = pneg %p363
      %p370 = scmp.eq.s32.totalorder %s30, 3
      %p371 = por %p369, %p370
      %p372 = scmp.ne.s32.totalorder %s364, %s367
      %p373 = scmp.eq.s32.totalorder %s30, 0
      %p374 = por %p372, %p373
      %p375 = scmp.ne.s32.totalorder %s364, %s367
      %p376 = scmp.eq.s32.totalorder %s35, 3
      %p377 = por %p375, %p376
      %p378 = scmp.ne.s32.totalorder %s367, %s368
      %p379 = scmp.eq.s32.totalorder %s35, 0
      %p380 = por %p378, %p379
      %p381 = scmp.ne.s32.totalorder %s367, %s368
      %p382 = scmp.eq.s32.totalorder %s36, 3
      %p383 = por %p381, %p382
      %p385 = scmp.ne.s32.totalorder %s368, %s384
      %p386 = scmp.eq.s32.totalorder %s36, 0
      %p387 = por %p385, %p386
      %s388 = ssub.s32 %s37, %s49
      %p389 = scmp.eq.s32.totalorder %s388, 0
      %s391 = sadd.s32 %s390, 1
      %s392 = scalar_select %p389, %s390, %s391
      %p395 = pneg %p389
      %p396 = scmp.eq.s32.totalorder %s30, 3
      %p397 = por %p395, %p396
      %p398 = scmp.ne.s32.totalorder %s390, %s393
      %p399 = scmp.eq.s32.totalorder %s30, 0
      %p400 = por %p398, %p399
      %p401 = scmp.ne.s32.totalorder %s390, %s393
      %p402 = scmp.eq.s32.totalorder %s35, 3
      %p403 = por %p401, %p402
      %p404 = scmp.ne.s32.totalorder %s393, %s394
      %p405 = scmp.eq.s32.totalorder %s35, 0
      %p406 = por %p404, %p405
      %p407 = scmp.ne.s32.totalorder %s393, %s394
      %p408 = scmp.eq.s32.totalorder %s36, 3
      %p409 = por %p407, %p408
      %p411 = scmp.ne.s32.totalorder %s394, %s410
      %p412 = scmp.eq.s32.totalorder %s36, 0
      %p413 = por %p411, %p412
      %p414 = scmp.le.s32.totalorder 1, %s30
      %p415 = scmp.lt.s32.totalorder %s30, 5
      %p416 = pnand %p414, %p415
      %p417 = pneg %p416
      // Predicated region
      $region9: #{tpu_custom_call.1} parent=5 // pred_check
        _
      $region10: #{tpu_custom_call.1} parent=5 // pred_check_branch
        %419 = sbr.rel (%p416) target = $region12
      $region11: #{tpu_custom_call.1} parent=5 // pred_region
        %s420 = ssub.s32 %s30, 1
      $region12: #{tpu_custom_call.1} parent=5 // pred_fallthru
        _
      %p421 = scmp.lt.s32.totalorder %s30, 4
      // Predicated region
      $region13: #{tpu_custom_call.1} parent=5 // pred_check
        %p422 = pneg %p421
      $region14: #{tpu_custom_call.1} parent=5 // pred_check_branch
        %424 = sbr.rel (%p422) target = $region16
      $region15: #{tpu_custom_call.1} parent=5 // pred_region
        // Predicated region
        $region17: #{tpu_custom_call.1} parent=15 // pred_check
          %p425 = pneg %p62
        $region18: #{tpu_custom_call.1} parent=15 // pred_check_branch
          %427 = sbr.rel (%p425) target = $region20
        $region19: #{tpu_custom_call.1} parent=15 // pred_region
          %s428 = sand.u32 %s52, 1
          %s429 = scalar_lea.sflag [#allocation6], %s428
          %s430 = sand.u32 %s52, 1
          %s431 = smul.addr %s430, 8
          %s432 = scalar_lea.vmem [#allocation5], %s431
          %s434 = ssub.s32 128, 128
          %435 = vsyncadd %s429, %s434
          %s436 = smul.addr %s37, 128
          %s437 = scalar_lea.hbm %s1, %s436
          %s439 = sshll.u32 %s432, 4
          %s440 = int_to_ptr.vmem [resolvable:$true] %s439
          %442 = dma.hbm_to_vmem [thread:$0]  %s437, 128, %s440, %s429
        $region20: #{tpu_custom_call.1} parent=15 // pred_fallthru
          _
        // Predicated region
        $region21: #{tpu_custom_call.1} parent=15 // pred_check
          %p443 = pneg %p88
        $region22: #{tpu_custom_call.1} parent=15 // pred_check_branch
          %445 = sbr.rel (%p443) target = $region24
        $region23: #{tpu_custom_call.1} parent=15 // pred_region
          %p446 = scmp.lt.s32.totalorder %s38, 1
          %s447 = scalar_select %p446, %s38, 1
          %s448 = smul.addr %s447, 4
          %s449 = smul.addr %s448, 4
          %s450 = scalar_lea.vmem %s2, %s449
        $region24: #{tpu_custom_call.1} parent=15 // pred_fallthru
          _
        // Predicated region
        $region25: #{tpu_custom_call.1} parent=15 // pred_check
          %p451 = pneg %p114
        $region26: #{tpu_custom_call.1} parent=15 // pred_check_branch
          %453 = sbr.rel (%p451) target = $region28
        $region27: #{tpu_custom_call.1} parent=15 // pred_region
          %p454 = scmp.lt.s32.totalorder %s38, 1
          %s455 = scalar_select %p454, %s38, 1
          %s456 = scalar_lea.vmem %s3, %s455
        $region28: #{tpu_custom_call.1} parent=15 // pred_fallthru
          _
        // Predicated region
        $region29: #{tpu_custom_call.1} parent=15 // pred_check
          %p457 = pneg %p140
        $region30: #{tpu_custom_call.1} parent=15 // pred_check_branch
          %459 = sbr.rel (%p457) target = $region32
        $region31: #{tpu_custom_call.1} parent=15 // pred_region
          %p460 = scmp.lt.s32.totalorder %s38, 1
          %s461 = scalar_select %p460, %s38, 1
          %s462 = smul.addr %s461, 4
          %s463 = smul.addr %s462, 4
          %s464 = scalar_lea.vmem %s4, %s463
        $region32: #{tpu_custom_call.1} parent=15 // pred_fallthru
          _
        // Predicated region
        $region33: #{tpu_custom_call.1} parent=15 // pred_check
          %p465 = pneg %p166
        $region34: #{tpu_custom_call.1} parent=15 // pred_check_branch
          %467 = sbr.rel (%p465) target = $region36
        $region35: #{tpu_custom_call.1} parent=15 // pred_region
          %p468 = scmp.lt.s32.totalorder %s38, 1
          %s469 = scalar_select %p468, %s38, 1
          %s470 = scalar_lea.vmem %s5, %s469
        $region36: #{tpu_custom_call.1} parent=15 // pred_fallthru
          _
        // Predicated region
        $region37: #{tpu_custom_call.1} parent=15 // pred_check
          %p471 = pneg %p192
        $region38: #{tpu_custom_call.1} parent=15 // pred_check_branch
          %473 = sbr.rel (%p471) target = $region40
        $region39: #{tpu_custom_call.1} parent=15 // pred_region
          %p474 = scmp.lt.s32.totalorder %s38, 1
          %s475 = scalar_select %p474, %s38, 1
          %s476 = scalar_lea.vmem %s6, %s475
        $region40: #{tpu_custom_call.1} parent=15 // pred_fallthru
          _
        // Predicated region
        $region41: #{tpu_custom_call.1} parent=15 // pred_check
          %p477 = pneg %p218
        $region42: #{tpu_custom_call.1} parent=15 // pred_check_branch
          %479 = sbr.rel (%p477) target = $region44
        $region43: #{tpu_custom_call.1} parent=15 // pred_region
          %p480 = scmp.lt.s32.totalorder %s38, 1
          %s481 = scalar_select %p480, %s38, 1
          %s482 = scalar_lea.vmem %s7, %s481
        $region44: #{tpu_custom_call.1} parent=15 // pred_fallthru
          _
        // Predicated region
        $region45: #{tpu_custom_call.1} parent=15 // pred_check
          %p483 = pneg %p244
        $region46: #{tpu_custom_call.1} parent=15 // pred_check_branch
          %485 = sbr.rel (%p483) target = $region48
        $region47: #{tpu_custom_call.1} parent=15 // pred_region
          %p486 = scmp.lt.s32.totalorder %s38, 1
          %s487 = scalar_select %p486, %s38, 1
          %s488 = smul.addr %s487, 4
          %s489 = smul.addr %s488, 4
          %s490 = scalar_lea.vmem %s8, %s489
        $region48: #{tpu_custom_call.1} parent=15 // pred_fallthru
          _
        // Predicated region
        $region49: #{tpu_custom_call.1} parent=15 // pred_check
          %p491 = pneg %p270
        $region50: #{tpu_custom_call.1} parent=15 // pred_check_branch
          %493 = sbr.rel (%p491) target = $region52
        $region51: #{tpu_custom_call.1} parent=15 // pred_region
          %p494 = scmp.lt.s32.totalorder %s38, 1
          %s495 = scalar_select %p494, %s38, 1
          %s496 = scalar_lea.vmem %s9, %s495
        $region52: #{tpu_custom_call.1} parent=15 // pred_fallthru
          _
        // Predicated region
        $region53: #{tpu_custom_call.1} parent=15 // pred_check
          %p497 = pneg %p296
        $region54: #{tpu_custom_call.1} parent=15 // pred_check_branch
          %499 = sbr.rel (%p497) target = $region56
        $region55: #{tpu_custom_call.1} parent=15 // pred_region
          %p500 = scmp.lt.s32.totalorder %s38, 1
          %s501 = scalar_select %p500, %s38, 1
          %s502 = smul.addr %s501, 8
          %s503 = smul.addr %s502, 4
          %s504 = scalar_lea.vmem %s10, %s503
        $region56: #{tpu_custom_call.1} parent=15 // pred_fallthru
          _
        // Predicated region
        $region57: #{tpu_custom_call.1} parent=15 // pred_check
          %p505 = pneg %p322
        $region58: #{tpu_custom_call.1} parent=15 // pred_check_branch
          %507 = sbr.rel (%p505) target = $region60
        $region59: #{tpu_custom_call.1} parent=15 // pred_region
          %p508 = scmp.lt.s32.totalorder %s38, 1
          %s509 = scalar_select %p508, %s38, 1
          %s510 = scalar_lea.vmem %s11, %s509
        $region60: #{tpu_custom_call.1} parent=15 // pred_fallthru
          _
        // Predicated region
        $region61: #{tpu_custom_call.1} parent=15 // pred_check
          %p511 = pneg %p348
        $region62: #{tpu_custom_call.1} parent=15 // pred_check_branch
          %513 = sbr.rel (%p511) target = $region64
        $region63: #{tpu_custom_call.1} parent=15 // pred_region
          %p514 = scmp.lt.s32.totalorder %s38, 1
          %s515 = scalar_select %p514, %s38, 1
          %s516 = scalar_lea.vmem %s12, %s515
        $region64: #{tpu_custom_call.1} parent=15 // pred_fallthru
          _
        // Predicated region
        $region65: #{tpu_custom_call.1} parent=15 // pred_check
          %p517 = pneg %p374
        $region66: #{tpu_custom_call.1} parent=15 // pred_check_branch
          %519 = sbr.rel (%p517) target = $region68
        $region67: #{tpu_custom_call.1} parent=15 // pred_region
          %p520 = scmp.lt.s32.totalorder %s38, 1
          %s521 = scalar_select %p520, %s38, 1
          %s522 = scalar_lea.vmem %s13, %s521
        $region68: #{tpu_custom_call.1} parent=15 // pred_fallthru
          _
      $region16: #{tpu_custom_call.1} parent=5 // pred_fallthru
        _
      %p523 = scmp.le.s32.totalorder 1, %s30
      %p524 = scmp.lt.s32.totalorder %s30, 5
      %p525 = pnand %p523, %p524
      %p526 = pneg %p525
      // Predicated region
      $region69: #{tpu_custom_call.1} parent=5 // pred_check
        _
      $region70: #{tpu_custom_call.1} parent=5 // pred_check_branch
        %528 = sbr.rel (%p525) target = $region72
      $region71: #{tpu_custom_call.1} parent=5 // pred_region
        %s529 = ssub.s32 %s30, 1
        %s530 = sand.u32 %s55, 1
        %s531 = scalar_lea.sflag [#allocation6], %s530
        %s532 = sand.u32 %s55, 1
        %s533 = smul.addr %s532, 8
        %s534 = scalar_lea.vmem [#allocation5], %s533
        // Predicated region
        $region73: #{tpu_custom_call.1} parent=71 // pred_check
          %p535 = pneg %p68
        $region74: #{tpu_custom_call.1} parent=71 // pred_check_branch
          %537 = sbr.rel (%p535) target = $region76
        $region75: #{tpu_custom_call.1} parent=71 // pred_region
          %538 = dma.done %s531, 128
        $region76: #{tpu_custom_call.1} parent=71 // pred_fallthru
          _
        %s539 = sand.u32 %s55, 1
        %s540 = scalar_lea.sflag [#allocation6], %s539
        %s541 = sand.u32 %s55, 1
        %s542 = smul.addr %s541, 8
        %s543 = scalar_lea.vmem [#allocation5], %s542
        %p544 = pneg %p68
        %p545 = pneg %p65
        %p546 = scmp.lt.s32.totalorder %s40, 1
        %s547 = scalar_select %p546, %s40, 1
        %s548 = smul.addr %s547, 4
        %s549 = smul.addr %s548, 4
        %s550 = scalar_lea.vmem %s2, %s549
        %p551 = pneg %p94
        %p552 = pneg %p91
        %p553 = scmp.lt.s32.totalorder %s40, 1
        %s554 = scalar_select %p553, %s40, 1
        %s555 = scalar_lea.vmem %s3, %s554
        %p556 = pneg %p120
        %p557 = pneg %p117
        %p558 = scmp.lt.s32.totalorder %s40, 1
        %s559 = scalar_select %p558, %s40, 1
        %s560 = smul.addr %s559, 4
        %s561 = smul.addr %s560, 4
        %s562 = scalar_lea.vmem %s4, %s561
        %p563 = pneg %p146
        %p564 = pneg %p143
        %p565 = scmp.lt.s32.totalorder %s40, 1
        %s566 = scalar_select %p565, %s40, 1
        %s567 = scalar_lea.vmem %s5, %s566
        %p568 = pneg %p172
        %p569 = pneg %p169
        %p570 = scmp.lt.s32.totalorder %s40, 1
        %s571 = scalar_select %p570, %s40, 1
        %s572 = scalar_lea.vmem %s6, %s571
        %p573 = pneg %p198
        %p574 = pneg %p195
        %p575 = scmp.lt.s32.totalorder %s40, 1
        %s576 = scalar_select %p575, %s40, 1
        %s577 = scalar_lea.vmem %s7, %s576
        %p578 = pneg %p224
        %p579 = pneg %p221
        %p580 = scmp.lt.s32.totalorder %s40, 1
        %s581 = scalar_select %p580, %s40, 1
        %s582 = smul.addr %s581, 4
        %s583 = smul.addr %s582, 4
        %s584 = scalar_lea.vmem %s8, %s583
        %p585 = pneg %p250
        %p586 = pneg %p247
        %p587 = scmp.lt.s32.totalorder %s40, 1
        %s588 = scalar_select %p587, %s40, 1
        %s589 = scalar_lea.vmem %s9, %s588
        %p590 = pneg %p276
        %p591 = pneg %p273
        %p592 = scmp.lt.s32.totalorder %s40, 1
        %s593 = scalar_select %p592, %s40, 1
        %s594 = smul.addr %s593, 8
        %s595 = smul.addr %s594, 4
        %s596 = scalar_lea.vmem %s10, %s595
        %p597 = pneg %p302
        %p598 = pneg %p299
        %p599 = scmp.lt.s32.totalorder %s40, 1
        %s600 = scalar_select %p599, %s40, 1
        %s601 = scalar_lea.vmem %s11, %s600
        %p602 = pneg %p328
        %p603 = pneg %p325
        %p604 = scmp.lt.s32.totalorder %s40, 1
        %s605 = scalar_select %p604, %s40, 1
        %s606 = scalar_lea.vmem %s12, %s605
        %p607 = pneg %p354
        %p608 = pneg %p351
        %p609 = scmp.lt.s32.totalorder %s40, 1
        %s610 = scalar_select %p609, %s40, 1
        %s611 = scalar_lea.vmem %s13, %s610
        %p612 = pneg %p380
        %p613 = pneg %p377
        %p614 = pneg %p406
        %p615 = pneg %p403
        %s616 = sand.u32 %s393, 1
        %s617 = scalar_lea.sflag [#allocation7], %s616
        %s618 = sand.u32 %s393, 1
        %s619 = smul.addr %s618, 8
        %s620 = scalar_lea.vmem [#allocation8], %s619
        %p621 = scmp.lt.s32.totalorder %s40, 1
        %s622 = scalar_select %p621, %s40, 1
        %s623 = smul.addr %s622, 4
        %s624 = smul.addr %s623, 4
        %s625 = scalar_lea.vmem %s2, %s624
        %p626 = scmp.lt.s32.totalorder %s40, 1
        %s627 = scalar_select %p626, %s40, 1
        %s628 = scalar_lea.vmem %s3, %s627
        %p629 = scmp.lt.s32.totalorder %s40, 1
        %s630 = scalar_select %p629, %s40, 1
        %s631 = smul.addr %s630, 4
        %s632 = smul.addr %s631, 4
        %s633 = scalar_lea.vmem %s4, %s632
        %p634 = scmp.lt.s32.totalorder %s40, 1
        %s635 = scalar_select %p634, %s40, 1
        %s636 = scalar_lea.vmem %s5, %s635
        %p637 = scmp.lt.s32.totalorder %s40, 1
        %s638 = scalar_select %p637, %s40, 1
        %s639 = scalar_lea.vmem %s6, %s638
        %p640 = scmp.lt.s32.totalorder %s40, 1
        %s641 = scalar_select %p640, %s40, 1
        %s642 = scalar_lea.vmem %s7, %s641
        %p643 = scmp.lt.s32.totalorder %s40, 1
        %s644 = scalar_select %p643, %s40, 1
        %s645 = smul.addr %s644, 4
        %s646 = smul.addr %s645, 4
        %s647 = scalar_lea.vmem %s8, %s646
        %p648 = scmp.lt.s32.totalorder %s40, 1
        %s649 = scalar_select %p648, %s40, 1
        %s650 = scalar_lea.vmem %s9, %s649
        %p651 = scmp.lt.s32.totalorder %s40, 1
        %s652 = scalar_select %p651, %s40, 1
        %s653 = smul.addr %s652, 8
        %s654 = smul.addr %s653, 4
        %s655 = scalar_lea.vmem %s10, %s654
        %p656 = scmp.lt.s32.totalorder %s40, 1
        %s657 = scalar_select %p656, %s40, 1
        %s658 = scalar_lea.vmem %s11, %s657
        %p659 = scmp.lt.s32.totalorder %s40, 1
        %s660 = scalar_select %p659, %s40, 1
        %s661 = scalar_lea.vmem %s12, %s660
        %p662 = scmp.lt.s32.totalorder %s40, 1
        %s663 = scalar_select %p662, %s40, 1
        %s664 = scalar_lea.vmem %s13, %s663
        %s666 = sld [smem:[#allocation4 + %s39]]
        %p667 = scmp.eq.s32.totalorder %s40, 0
        // Predicated region
        $region77: #{tpu_custom_call.1} parent=71 // pred_check
          %p668 = pneg %p667
        $region78: #{tpu_custom_call.1} parent=71 // pred_check_branch
          %670 = sbr.rel (%p668) target = $region80
        $region79: #{tpu_custom_call.1} parent=71 // pred_region
          %v671 = vld [vmem:[%s534] sm:$0xff]
          %vm672 = vcmask 261120
          %673 = vst.msk [vmem:[#allocation2] sm:$0xff] %vm672, %v671
        $region80: #{tpu_custom_call.1} parent=71 // pred_fallthru
          _
        %v674 = vld [vmem:[#allocation2] sm:$0xff]
        %v675 = vpack.c.bf16 %v674, %v674
        %v676 = vld [vmem:[%s625] sm:$0xf]
        %v677 = vld [vmem:[%s625 + $0x4] sm:$0xf]
        %v678 = vld [vmem:[%s625 + $0x8] sm:$0xf]
        %v679 = vld [vmem:[%s625 + $0xc] sm:$0xf]
        %v680 = vld [vmem:[%s628] sm:$0x1]
        %v682 = vlaneseq
        %v683 = vshrl.u32 %v682, 7
        %v684 = vsub.s32 0, %v683
        %v685 = vrot.slane %v680, %v684
        %v691 = vunpack.c.l.b16 %v676
        %v692 = vunpack.c.l.b16 %v677
        %v693 = vunpack.c.l.b16 %v678
        %v694 = vunpack.c.l.b16 %v679
        %v695 = vpack.c.b16 %v692, %v691
        %v696 = vpack.c.b16 %v694, %v693
        %vm699 = vcmask 261120
        %v701 = vsel %vm699, %v675, 0
        %703 = vmatprep.subr.bf16.mxu0 0
        %704 = vmatpush1.bf16.msra.mxu0 0
        %705 = vmatprep.subr.bf16.mxu0 0
        %706 = vmatpush1.bf16.msra.mxu0 0
        %707 = vmatprep.subr.bf16.mxu0 0
        %708 = vmatpush1.bf16.msra.mxu0 0
        %709 = vmatprep.subr.bf16.mxu0 0
        %710 = vmatpush1.bf16.msra.mxu0 0
        %711 = vmatprep.subr.bf16.mxu0 0
        %712 = vmatpush1.bf16.msra.mxu0 0
        %713 = vmatprep.subr.bf16.mxu0 0
        %714 = vmatpush1.bf16.msra.mxu0 0
        %715 = vmatprep.subr.bf16.mxu0 0
        %716 = vmatpush1.bf16.msra.mxu0 %v696
        %717 = vmatprep.subr.bf16.mxu0 0
        %718 = vmatpush1.bf16.msra.mxu0 %v695
        %719 = vmatprep.subr.bf16.mxu0 0
        %720 = vmatpush2.bf16.msra.mxu0 0
        %721 = vmatprep.subr.bf16.mxu0 0
        %722 = vmatpush2.bf16.msra.mxu0 0
        %723 = vmatprep.subr.bf16.mxu0 0
        %724 = vmatpush2.bf16.msra.mxu0 0
        %725 = vmatprep.subr.bf16.mxu0 0
        %726 = vmatpush2.bf16.msra.mxu0 0
        %727 = vmatprep.subr.bf16.mxu0 0
        %728 = vmatpush2.bf16.msra.mxu0 0
        %729 = vmatprep.subr.bf16.mxu0 0
        %730 = vmatpush2.bf16.msra.mxu0 0
        %731 = vmatprep.subr.bf16.mxu0 0
        %732 = vmatpush2.bf16.msra.mxu0 0
        %733 = vmatprep.subr.bf16.mxu0 0
        %734 = vmatpush2.bf16.msra.mxu0 0
        %735 = vmatprep.mubr.bf16.mxu0 0
        %736 = vmatmul.mubr.bf16.gmra.mxu0 %v701
        %v737 = vpop.f32.mrf.mxu0
        %v738 = vadd.f32 %v685, %v737
        %v739 = vpop.f32.mrf.mxu0
        %v740 = vpop.f32.mrf.mxu0
        %v741 = vpop.f32.mrf.mxu0
        %742 = vdwg.mxu0
        %v743 = vmul.f32 %v738, 0.35355338
        %745 = vrot.lane.b32.xlu0 %v743, 120
        %v746 = vpop.permute.xlu0 %745
        %748 = vrot.lane.b32.xlu0 %v743, 112
        %v749 = vpop.permute.xlu0 %748
        %751 = vrot.lane.b32.xlu0 %v743, 104
        %v752 = vpop.permute.xlu0 %751
        %v754 = vcombine.low %v743, %v749
        %v755 = vcombine.high %v743, %v749
        %v757 = vunpack.c.l.s4 1983009808
        %v758 = vunpack.c.0.s8 %v757
        %v759 = vlaneseq
        %v760 = vshrl.u32 %v759, 7
        %v761 = vsub.s32 %v758, %v760
        %v762 = vrot.slane %v754, %v761
        %v764 = vunpack.c.l.s4 1983009808
        %v765 = vunpack.c.0.s8 %v764
        %v766 = vlaneseq
        %v767 = vshrl.u32 %v766, 7
        %v768 = vsub.s32 %v765, %v767
        %v769 = vrot.slane %v755, %v768
        %v770 = vcombine.low %v746, %v752
        %v771 = vcombine.high %v746, %v752
        %v773 = vunpack.c.l.s4 1983009808
        %v774 = vunpack.c.0.s8 %v773
        %v775 = vlaneseq
        %v776 = vshrl.u32 %v775, 7
        %v777 = vsub.s32 %v774, %v776
        %v778 = vrot.slane %v770, %v777
        %v780 = vunpack.c.l.s4 1983009808
        %v781 = vunpack.c.0.s8 %v780
        %v782 = vlaneseq
        %v783 = vshrl.u32 %v782, 7
        %v784 = vsub.s32 %v781, %v783
        %v785 = vrot.slane %v771, %v784
        %v786 = vcombine.low %v762, %v778
        %v787 = vcombine.high %v762, %v778
        %v789 = vunpack.c.l.s4 1934713408
        %v790 = vunpack.c.0.s8 %v789
        %v791 = vlaneseq
        %v792 = vshrl.u32 %v791, 7
        %v793 = vsub.s32 %v790, %v792
        %v794 = vrot.slane %v786, %v793
        %v796 = vunpack.c.l.s4 1934713408
        %v797 = vunpack.c.0.s8 %v796
        %v798 = vlaneseq
        %v799 = vshrl.u32 %v798, 7
        %v800 = vsub.s32 %v797, %v799
        %v801 = vrot.slane %v787, %v800
        %v802 = vcombine.low %v769, %v785
        %v803 = vcombine.high %v769, %v785
        %v805 = vunpack.c.l.s4 1934713408
        %v806 = vunpack.c.0.s8 %v805
        %v807 = vlaneseq
        %v808 = vshrl.u32 %v807, 7
        %v809 = vsub.s32 %v806, %v808
        %v810 = vrot.slane %v802, %v809
        %v812 = vunpack.c.l.s4 1934713408
        %v813 = vunpack.c.0.s8 %v812
        %v814 = vlaneseq
        %v815 = vshrl.u32 %v814, 7
        %v816 = vsub.s32 %v813, %v815
        %v817 = vrot.slane %v803, %v816
        %v818 = vcombine.high %v794, 0.0
        %v819 = vcombine.high %v801, 0.0
        %v820 = vcombine.high %v810, 0.0
        %v821 = vcombine.high %v817, 0.0
        %v822 = vcombine.low %v794, %v801
        %v824 = vunpack.c.l.s4 1983009808
        %v825 = vunpack.c.0.s8 %v824
        %v826 = vlaneseq
        %v827 = vshrl.u32 %v826, 7
        %v828 = vsub.s32 %v825, %v827
        %v829 = vrot.slane %v822, %v828
        %v830 = vcombine.low %v818, %v819
        %v832 = vunpack.c.l.s4 1983009808
        %v833 = vunpack.c.0.s8 %v832
        %v834 = vlaneseq
        %v835 = vshrl.u32 %v834, 7
        %v836 = vsub.s32 %v833, %v835
        %v837 = vrot.slane %v830, %v836
        %v838 = vcombine.low %v810, %v817
        %v840 = vunpack.c.l.s4 1983009808
        %v841 = vunpack.c.0.s8 %v840
        %v842 = vlaneseq
        %v843 = vshrl.u32 %v842, 7
        %v844 = vsub.s32 %v841, %v843
        %v845 = vrot.slane %v838, %v844
        %v846 = vcombine.low %v820, %v821
        %v848 = vunpack.c.l.s4 1983009808
        %v849 = vunpack.c.0.s8 %v848
        %v850 = vlaneseq
        %v851 = vshrl.u32 %v850, 7
        %v852 = vsub.s32 %v849, %v851
        %v853 = vrot.slane %v846, %v852
        %v854 = vcombine.low %v829, %v837
        %v855 = vcombine.high %v829, %v837
        %v857 = vunpack.c.l.s4 1934713408
        %v858 = vunpack.c.0.s8 %v857
        %v859 = vlaneseq
        %v860 = vshrl.u32 %v859, 7
        %v861 = vsub.s32 %v858, %v860
        %v862 = vrot.slane %v854, %v861
        %v864 = vunpack.c.l.s4 1934713408
        %v865 = vunpack.c.0.s8 %v864
        %v866 = vlaneseq
        %v867 = vshrl.u32 %v866, 7
        %v868 = vsub.s32 %v865, %v867
        %v869 = vrot.slane %v855, %v868
        %v870 = vcombine.low %v845, %v853
        %v871 = vcombine.high %v845, %v853
        %v873 = vunpack.c.l.s4 1934713408
        %v874 = vunpack.c.0.s8 %v873
        %v875 = vlaneseq
        %v876 = vshrl.u32 %v875, 7
        %v877 = vsub.s32 %v874, %v876
        %v878 = vrot.slane %v870, %v877
        %v880 = vunpack.c.l.s4 1934713408
        %v881 = vunpack.c.0.s8 %v880
        %v882 = vlaneseq
        %v883 = vshrl.u32 %v882, 7
        %v884 = vsub.s32 %v881, %v883
        %v885 = vrot.slane %v871, %v884
        %v886 = vcombine.low %v862, %v878
        %v887 = vcombine.high %v862, %v878
        %v888 = vcombine.low %v869, %v885
        %v889 = vcombine.high %v869, %v885
        %v890 = vpack.c.bf16 %v886, %v886
        %v891 = vpack.c.bf16 %v887, %v887
        %v892 = vpack.c.bf16 %v888, %v888
        %v893 = vpack.c.bf16 %v889, %v889
        %895 = vrot.lane.b32.xlu0 %v738, 120
        %v896 = vpop.permute.xlu0 %895
        %897 = vrot.lane.b32.xlu0 %v738, 112
        %v898 = vpop.permute.xlu0 %897
        %899 = vrot.lane.b32.xlu0 %v738, 104
        %v900 = vpop.permute.xlu0 %899
        %901 = vrot.lane.b32.xlu0 %v738, 96
        %v902 = vpop.permute.xlu0 %901
        %903 = vrot.lane.b32.xlu0 %v896, 96
        %v904 = vpop.permute.xlu0 %903
        %905 = vrot.lane.b32.xlu0 %v898, 96
        %v906 = vpop.permute.xlu0 %905
        %907 = vrot.lane.b32.xlu0 %v900, 96
        %v908 = vpop.permute.xlu0 %907
        %v913 = vcombine.low %v902, %v906
        %v914 = vcombine.high %v902, %v906
        %v916 = vunpack.c.l.s4 1983009808
        %v917 = vunpack.c.0.s8 %v916
        %v918 = vlaneseq
        %v919 = vshrl.u32 %v918, 7
        %v920 = vsub.s32 %v917, %v919
        %v921 = vrot.slane %v913, %v920
        %v923 = vunpack.c.l.s4 1983009808
        %v924 = vunpack.c.0.s8 %v923
        %v925 = vlaneseq
        %v926 = vshrl.u32 %v925, 7
        %v927 = vsub.s32 %v924, %v926
        %v928 = vrot.slane %v914, %v927
        %v929 = vcombine.low %v904, %v908
        %v930 = vcombine.high %v904, %v908
        %v932 = vunpack.c.l.s4 1983009808
        %v933 = vunpack.c.0.s8 %v932
        %v934 = vlaneseq
        %v935 = vshrl.u32 %v934, 7
        %v936 = vsub.s32 %v933, %v935
        %v937 = vrot.slane %v929, %v936
        %v939 = vunpack.c.l.s4 1983009808
        %v940 = vunpack.c.0.s8 %v939
        %v941 = vlaneseq
        %v942 = vshrl.u32 %v941, 7
        %v943 = vsub.s32 %v940, %v942
        %v944 = vrot.slane %v930, %v943
        %v945 = vcombine.low %v921, %v937
        %v946 = vcombine.high %v921, %v937
        %v948 = vunpack.c.l.s4 1934713408
        %v949 = vunpack.c.0.s8 %v948
        %v950 = vlaneseq
        %v951 = vshrl.u32 %v950, 7
        %v952 = vsub.s32 %v949, %v951
        %v953 = vrot.slane %v945, %v952
        %v955 = vunpack.c.l.s4 1934713408
        %v956 = vunpack.c.0.s8 %v955
        %v957 = vlaneseq
        %v958 = vshrl.u32 %v957, 7
        %v959 = vsub.s32 %v956, %v958
        %v960 = vrot.slane %v946, %v959
        %v961 = vcombine.low %v928, %v944
        %v962 = vcombine.high %v928, %v944
        %v964 = vunpack.c.l.s4 1934713408
        %v965 = vunpack.c.0.s8 %v964
        %v966 = vlaneseq
        %v967 = vshrl.u32 %v966, 7
        %v968 = vsub.s32 %v965, %v967
        %v969 = vrot.slane %v961, %v968
        %v971 = vunpack.c.l.s4 1934713408
        %v972 = vunpack.c.0.s8 %v971
        %v973 = vlaneseq
        %v974 = vshrl.u32 %v973, 7
        %v975 = vsub.s32 %v972, %v974
        %v976 = vrot.slane %v962, %v975
        %v977 = vcombine.high %v953, 0.0
        %v978 = vcombine.high %v960, 0.0
        %v979 = vcombine.high %v969, 0.0
        %v980 = vcombine.high %v976, 0.0
        %v981 = vcombine.low %v953, %v960
        %v983 = vunpack.c.l.s4 1983009808
        %v984 = vunpack.c.0.s8 %v983
        %v985 = vlaneseq
        %v986 = vshrl.u32 %v985, 7
        %v987 = vsub.s32 %v984, %v986
        %v988 = vrot.slane %v981, %v987
        %v989 = vcombine.low %v977, %v978
        %v991 = vunpack.c.l.s4 1983009808
        %v992 = vunpack.c.0.s8 %v991
        %v993 = vlaneseq
        %v994 = vshrl.u32 %v993, 7
        %v995 = vsub.s32 %v992, %v994
        %v996 = vrot.slane %v989, %v995
        %v997 = vcombine.low %v969, %v976
        %v999 = vunpack.c.l.s4 1983009808
        %v1000 = vunpack.c.0.s8 %v999
        %v1001 = vlaneseq
        %v1002 = vshrl.u32 %v1001, 7
        %v1003 = vsub.s32 %v1000, %v1002
        %v1004 = vrot.slane %v997, %v1003
        %v1005 = vcombine.low %v979, %v980
        %v1007 = vunpack.c.l.s4 1983009808
        %v1008 = vunpack.c.0.s8 %v1007
        %v1009 = vlaneseq
        %v1010 = vshrl.u32 %v1009, 7
        %v1011 = vsub.s32 %v1008, %v1010
        %v1012 = vrot.slane %v1005, %v1011
        %v1013 = vcombine.low %v988, %v996
        %v1014 = vcombine.high %v988, %v996
        %v1016 = vunpack.c.l.s4 1934713408
        %v1017 = vunpack.c.0.s8 %v1016
        %v1018 = vlaneseq
        %v1019 = vshrl.u32 %v1018, 7
        %v1020 = vsub.s32 %v1017, %v1019
        %v1021 = vrot.slane %v1013, %v1020
        %v1023 = vunpack.c.l.s4 1934713408
        %v1024 = vunpack.c.0.s8 %v1023
        %v1025 = vlaneseq
        %v1026 = vshrl.u32 %v1025, 7
        %v1027 = vsub.s32 %v1024, %v1026
        %v1028 = vrot.slane %v1014, %v1027
        %v1029 = vcombine.low %v1004, %v1012
        %v1030 = vcombine.high %v1004, %v1012
        %v1032 = vunpack.c.l.s4 1934713408
        %v1033 = vunpack.c.0.s8 %v1032
        %v1034 = vlaneseq
        %v1035 = vshrl.u32 %v1034, 7
        %v1036 = vsub.s32 %v1033, %v1035
        %v1037 = vrot.slane %v1029, %v1036
        %v1039 = vunpack.c.l.s4 1934713408
        %v1040 = vunpack.c.0.s8 %v1039
        %v1041 = vlaneseq
        %v1042 = vshrl.u32 %v1041, 7
        %v1043 = vsub.s32 %v1040, %v1042
        %v1044 = vrot.slane %v1030, %v1043
        %v1045 = vcombine.low %v1021, %v1037
        %v1046 = vcombine.high %v1021, %v1037
        %v1047 = vcombine.low %v1028, %v1044
        %v1048 = vcombine.high %v1028, %v1044
        %v1049 = vpack.c.bf16 %v1045, %v1045
        %v1050 = vpack.c.bf16 %v1046, %v1046
        %v1051 = vpack.c.bf16 %v1047, %v1047
        %v1052 = vpack.c.bf16 %v1048, %v1048
        %1053 = vrot.lane.b32.xlu0 %v738, 64
        %v1054 = vpop.permute.xlu0 %1053
        %1055 = vrot.lane.b32.xlu0 %v896, 64
        %v1056 = vpop.permute.xlu0 %1055
        %1057 = vrot.lane.b32.xlu0 %v898, 64
        %v1058 = vpop.permute.xlu0 %1057
        %1059 = vrot.lane.b32.xlu0 %v900, 64
        %v1060 = vpop.permute.xlu0 %1059
        %v1065 = vcombine.low %v1054, %v1058
        %v1066 = vcombine.high %v1054, %v1058
        %v1068 = vunpack.c.l.s4 1983009808
        %v1069 = vunpack.c.0.s8 %v1068
        %v1070 = vlaneseq
        %v1071 = vshrl.u32 %v1070, 7
        %v1072 = vsub.s32 %v1069, %v1071
        %v1073 = vrot.slane %v1065, %v1072
        %v1075 = vunpack.c.l.s4 1983009808
        %v1076 = vunpack.c.0.s8 %v1075
        %v1077 = vlaneseq
        %v1078 = vshrl.u32 %v1077, 7
        %v1079 = vsub.s32 %v1076, %v1078
        %v1080 = vrot.slane %v1066, %v1079
        %v1081 = vcombine.low %v1056, %v1060
        %v1082 = vcombine.high %v1056, %v1060
        %v1084 = vunpack.c.l.s4 1983009808
        %v1085 = vunpack.c.0.s8 %v1084
        %v1086 = vlaneseq
        %v1087 = vshrl.u32 %v1086, 7
        %v1088 = vsub.s32 %v1085, %v1087
        %v1089 = vrot.slane %v1081, %v1088
        %v1091 = vunpack.c.l.s4 1983009808
        %v1092 = vunpack.c.0.s8 %v1091
        %v1093 = vlaneseq
        %v1094 = vshrl.u32 %v1093, 7
        %v1095 = vsub.s32 %v1092, %v1094
        %v1096 = vrot.slane %v1082, %v1095
        %v1097 = vcombine.low %v1073, %v1089
        %v1098 = vcombine.high %v1073, %v1089
        %v1100 = vunpack.c.l.s4 1934713408
        %v1101 = vunpack.c.0.s8 %v1100
        %v1102 = vlaneseq
        %v1103 = vshrl.u32 %v1102, 7
        %v1104 = vsub.s32 %v1101, %v1103
        %v1105 = vrot.slane %v1097, %v1104
        %v1107 = vunpack.c.l.s4 1934713408
        %v1108 = vunpack.c.0.s8 %v1107
        %v1109 = vlaneseq
        %v1110 = vshrl.u32 %v1109, 7
        %v1111 = vsub.s32 %v1108, %v1110
        %v1112 = vrot.slane %v1098, %v1111
        %v1113 = vcombine.low %v1080, %v1096
        %v1114 = vcombine.high %v1080, %v1096
        %v1116 = vunpack.c.l.s4 1934713408
        %v1117 = vunpack.c.0.s8 %v1116
        %v1118 = vlaneseq
        %v1119 = vshrl.u32 %v1118, 7
        %v1120 = vsub.s32 %v1117, %v1119
        %v1121 = vrot.slane %v1113, %v1120
        %v1123 = vunpack.c.l.s4 1934713408
        %v1124 = vunpack.c.0.s8 %v1123
        %v1125 = vlaneseq
        %v1126 = vshrl.u32 %v1125, 7
        %v1127 = vsub.s32 %v1124, %v1126
        %v1128 = vrot.slane %v1114, %v1127
        %v1129 = vcombine.high %v1105, 0.0
        %v1130 = vcombine.high %v1112, 0.0
        %v1131 = vcombine.high %v1121, 0.0
        %v1132 = vcombine.high %v1128, 0.0
        %v1133 = vcombine.low %v1105, %v1112
        %v1135 = vunpack.c.l.s4 1983009808
        %v1136 = vunpack.c.0.s8 %v1135
        %v1137 = vlaneseq
        %v1138 = vshrl.u32 %v1137, 7
        %v1139 = vsub.s32 %v1136, %v1138
        %v1140 = vrot.slane %v1133, %v1139
        %v1141 = vcombine.low %v1129, %v1130
        %v1143 = vunpack.c.l.s4 1983009808
        %v1144 = vunpack.c.0.s8 %v1143
        %v1145 = vlaneseq
        %v1146 = vshrl.u32 %v1145, 7
        %v1147 = vsub.s32 %v1144, %v1146
        %v1148 = vrot.slane %v1141, %v1147
        %v1149 = vcombine.low %v1121, %v1128
        %v1151 = vunpack.c.l.s4 1983009808
        %v1152 = vunpack.c.0.s8 %v1151
        %v1153 = vlaneseq
        %v1154 = vshrl.u32 %v1153, 7
        %v1155 = vsub.s32 %v1152, %v1154
        %v1156 = vrot.slane %v1149, %v1155
        %v1157 = vcombine.low %v1131, %v1132
        %v1159 = vunpack.c.l.s4 1983009808
        %v1160 = vunpack.c.0.s8 %v1159
        %v1161 = vlaneseq
        %v1162 = vshrl.u32 %v1161, 7
        %v1163 = vsub.s32 %v1160, %v1162
        %v1164 = vrot.slane %v1157, %v1163
        %v1165 = vcombine.low %v1140, %v1148
        %v1166 = vcombine.high %v1140, %v1148
        %v1168 = vunpack.c.l.s4 1934713408
        %v1169 = vunpack.c.0.s8 %v1168
        %v1170 = vlaneseq
        %v1171 = vshrl.u32 %v1170, 7
        %v1172 = vsub.s32 %v1169, %v1171
        %v1173 = vrot.slane %v1165, %v1172
        %v1175 = vunpack.c.l.s4 1934713408
        %v1176 = vunpack.c.0.s8 %v1175
        %v1177 = vlaneseq
        %v1178 = vshrl.u32 %v1177, 7
        %v1179 = vsub.s32 %v1176, %v1178
        %v1180 = vrot.slane %v1166, %v1179
        %v1181 = vcombine.low %v1156, %v1164
        %v1182 = vcombine.high %v1156, %v1164
        %v1184 = vunpack.c.l.s4 1934713408
        %v1185 = vunpack.c.0.s8 %v1184
        %v1186 = vlaneseq
        %v1187 = vshrl.u32 %v1186, 7
        %v1188 = vsub.s32 %v1185, %v1187
        %v1189 = vrot.slane %v1181, %v1188
        %v1191 = vunpack.c.l.s4 1934713408
        %v1192 = vunpack.c.0.s8 %v1191
        %v1193 = vlaneseq
        %v1194 = vshrl.u32 %v1193, 7
        %v1195 = vsub.s32 %v1192, %v1194
        %v1196 = vrot.slane %v1182, %v1195
        %v1197 = vcombine.low %v1173, %v1189
        %v1198 = vcombine.high %v1173, %v1189
        %v1199 = vcombine.low %v1180, %v1196
        %v1200 = vcombine.high %v1180, %v1196
        %v1201 = vpack.c.bf16 %v1197, %v1197
        %v1202 = vpack.c.bf16 %v1198, %v1198
        %v1203 = vpack.c.bf16 %v1199, %v1199
        %v1204 = vpack.c.bf16 %v1200, %v1200
        %vm1205 = vcmask 64512
        %v1207 = vsel %vm1205, %v890, 0
        %v1210 = vsel %vm1205, %v1049, 0
        %1212 = vmatprep.subr.bf16.mxu0 0
        %1213 = vmatpush1.bf16.xpose.msra.mxu0 0
        %1214 = vmatprep.subr.bf16.mxu0 0
        %1215 = vmatpush1.bf16.xpose.msra.mxu0 0
        %1216 = vmatprep.subr.bf16.mxu0 0
        %1217 = vmatpush1.bf16.xpose.msra.mxu0 0
        %1218 = vmatprep.subr.bf16.mxu0 0
        %1219 = vmatpush1.bf16.xpose.msra.mxu0 0
        %1220 = vmatprep.subr.bf16.mxu0 0
        %1221 = vmatpush1.bf16.xpose.msra.mxu0 0
        %1222 = vmatprep.subr.bf16.mxu0 0
        %1223 = vmatpush1.bf16.xpose.msra.mxu0 0
        %1224 = vmatprep.subr.bf16.mxu0 0
        %1225 = vmatpush1.bf16.xpose.msra.mxu0 0
        %1226 = vmatprep.subr.bf16.mxu0 0
        %1227 = vmatpush1.bf16.xpose.msra.mxu0 %v1210
        %1228 = vmatprep.subr.bf16.mxu0 0
        %1229 = vmatpush2.bf16.xpose.msra.mxu0 0
        %1230 = vmatprep.subr.bf16.mxu0 0
        %1231 = vmatpush2.bf16.xpose.msra.mxu0 0
        %1232 = vmatprep.subr.bf16.mxu0 0
        %1233 = vmatpush2.bf16.xpose.msra.mxu0 0
        %1234 = vmatprep.subr.bf16.mxu0 0
        %1235 = vmatpush2.bf16.xpose.msra.mxu0 0
        %1236 = vmatprep.subr.bf16.mxu0 0
        %1237 = vmatpush2.bf16.xpose.msra.mxu0 0
        %1238 = vmatprep.subr.bf16.mxu0 0
        %1239 = vmatpush2.bf16.xpose.msra.mxu0 0
        %1240 = vmatprep.subr.bf16.mxu0 0
        %1241 = vmatpush2.bf16.xpose.msra.mxu0 0
        %1242 = vmatprep.subr.bf16.mxu0 0
        %1243 = vmatpush2.bf16.xpose.msra.mxu0 0
        %1244 = vmatprep.mubr.bf16.mxu0 0
        %1245 = vmatmul.mubr.bf16.gmra.mxu0 %v1207
        %v1246 = vpop.f32.mrf.mxu0
        %v1247 = vadd.f32 0.0, %v1246
        %v1248 = vpop.f32.mrf.mxu0
        %v1249 = vpop.f32.mrf.mxu0
        %v1250 = vpop.f32.mrf.mxu0
        %1251 = vdwg.mxu0
        %v1253 = vsel %vm1205, %v891, 0
        %v1256 = vsel %vm1205, %v1050, 0
        %1258 = vmatprep.subr.bf16.mxu0 0
        %1259 = vmatpush1.bf16.xpose.msra.mxu0 0
        %1260 = vmatprep.subr.bf16.mxu0 0
        %1261 = vmatpush1.bf16.xpose.msra.mxu0 0
        %1262 = vmatprep.subr.bf16.mxu0 0
        %1263 = vmatpush1.bf16.xpose.msra.mxu0 0
        %1264 = vmatprep.subr.bf16.mxu0 0
        %1265 = vmatpush1.bf16.xpose.msra.mxu0 0
        %1266 = vmatprep.subr.bf16.mxu0 0
        %1267 = vmatpush1.bf16.xpose.msra.mxu0 0
        %1268 = vmatprep.subr.bf16.mxu0 0
        %1269 = vmatpush1.bf16.xpose.msra.mxu0 0
        %1270 = vmatprep.subr.bf16.mxu0 0
        %1271 = vmatpush1.bf16.xpose.msra.mxu0 0
        %1272 = vmatprep.subr.bf16.mxu0 0
        %1273 = vmatpush1.bf16.xpose.msra.mxu0 %v1256
        %1274 = vmatprep.subr.bf16.mxu0 0
        %1275 = vmatpush2.bf16.xpose.msra.mxu0 0
        %1276 = vmatprep.subr.bf16.mxu0 0
        %1277 = vmatpush2.bf16.xpose.msra.mxu0 0
        %1278 = vmatprep.subr.bf16.mxu0 0
        %1279 = vmatpush2.bf16.xpose.msra.mxu0 0
        %1280 = vmatprep.subr.bf16.mxu0 0
        %1281 = vmatpush2.bf16.xpose.msra.mxu0 0
        %1282 = vmatprep.subr.bf16.mxu0 0
        %1283 = vmatpush2.bf16.xpose.msra.mxu0 0
        %1284 = vmatprep.subr.bf16.mxu0 0
        %1285 = vmatpush2.bf16.xpose.msra.mxu0 0
        %1286 = vmatprep.subr.bf16.mxu0 0
        %1287 = vmatpush2.bf16.xpose.msra.mxu0 0
        %1288 = vmatprep.subr.bf16.mxu0 0
        %1289 = vmatpush2.bf16.xpose.msra.mxu0 0
        %1290 = vmatprep.mubr.bf16.mxu0 0
        %1291 = vmatmul.mubr.bf16.gmra.mxu0 %v1253
        %v1292 = vpop.f32.mrf.mxu0
        %v1293 = vadd.f32 0.0, %v1292
        %v1294 = vpop.f32.mrf.mxu0
        %v1295 = vpop.f32.mrf.mxu0
        %v1296 = vpop.f32.mrf.mxu0
        %1297 = vdwg.mxu0
        %v1299 = vsel %vm1205, %v892, 0
        %v1302 = vsel %vm1205, %v1051, 0
        %1304 = vmatprep.subr.bf16.mxu0 0
        %1305 = vmatpush1.bf16.xpose.msra.mxu0 0
        %1306 = vmatprep.subr.bf16.mxu0 0
        %1307 = vmatpush1.bf16.xpose.msra.mxu0 0
        %1308 = vmatprep.subr.bf16.mxu0 0
        %1309 = vmatpush1.bf16.xpose.msra.mxu0 0
        %1310 = vmatprep.subr.bf16.mxu0 0
        %1311 = vmatpush1.bf16.xpose.msra.mxu0 0
        %1312 = vmatprep.subr.bf16.mxu0 0
        %1313 = vmatpush1.bf16.xpose.msra.mxu0 0
        %1314 = vmatprep.subr.bf16.mxu0 0
        %1315 = vmatpush1.bf16.xpose.msra.mxu0 0
        %1316 = vmatprep.subr.bf16.mxu0 0
        %1317 = vmatpush1.bf16.xpose.msra.mxu0 0
        %1318 = vmatprep.subr.bf16.mxu0 0
        %1319 = vmatpush1.bf16.xpose.msra.mxu0 %v1302
        %1320 = vmatprep.subr.bf16.mxu0 0
        %1321 = vmatpush2.bf16.xpose.msra.mxu0 0
        %1322 = vmatprep.subr.bf16.mxu0 0
        %1323 = vmatpush2.bf16.xpose.msra.mxu0 0
        %1324 = vmatprep.subr.bf16.mxu0 0
        %1325 = vmatpush2.bf16.xpose.msra.mxu0 0
        %1326 = vmatprep.subr.bf16.mxu0 0
        %1327 = vmatpush2.bf16.xpose.msra.mxu0 0
        %1328 = vmatprep.subr.bf16.mxu0 0
        %1329 = vmatpush2.bf16.xpose.msra.mxu0 0
        %1330 = vmatprep.subr.bf16.mxu0 0
        %1331 = vmatpush2.bf16.xpose.msra.mxu0 0
        %1332 = vmatprep.subr.bf16.mxu0 0
        %1333 = vmatpush2.bf16.xpose.msra.mxu0 0
        %1334 = vmatprep.subr.bf16.mxu0 0
        %1335 = vmatpush2.bf16.xpose.msra.mxu0 0
        %1336 = vmatprep.mubr.bf16.mxu0 0
        %1337 = vmatmul.mubr.bf16.gmra.mxu0 %v1299
        %v1338 = vpop.f32.mrf.mxu0
        %v1339 = vadd.f32 0.0, %v1338
        %v1340 = vpop.f32.mrf.mxu0
        %v1341 = vpop.f32.mrf.mxu0
        %v1342 = vpop.f32.mrf.mxu0
        %1343 = vdwg.mxu0
        %v1345 = vsel %vm1205, %v893, 0
        %v1348 = vsel %vm1205, %v1052, 0
        %1350 = vmatprep.subr.bf16.mxu0 0
        %1351 = vmatpush1.bf16.xpose.msra.mxu0 0
        %1352 = vmatprep.subr.bf16.mxu0 0
        %1353 = vmatpush1.bf16.xpose.msra.mxu0 0
        %1354 = vmatprep.subr.bf16.mxu0 0
        %1355 = vmatpush1.bf16.xpose.msra.mxu0 0
        %1356 = vmatprep.subr.bf16.mxu0 0
        %1357 = vmatpush1.bf16.xpose.msra.mxu0 0
        %1358 = vmatprep.subr.bf16.mxu0 0
        %1359 = vmatpush1.bf16.xpose.msra.mxu0 0
        %1360 = vmatprep.subr.bf16.mxu0 0
        %1361 = vmatpush1.bf16.xpose.msra.mxu0 0
        %1362 = vmatprep.subr.bf16.mxu0 0
        %1363 = vmatpush1.bf16.xpose.msra.mxu0 0
        %1364 = vmatprep.subr.bf16.mxu0 0
        %1365 = vmatpush1.bf16.xpose.msra.mxu0 %v1348
        %1366 = vmatprep.subr.bf16.mxu0 0
        %1367 = vmatpush2.bf16.xpose.msra.mxu0 0
        %1368 = vmatprep.subr.bf16.mxu0 0
        %1369 = vmatpush2.bf16.xpose.msra.mxu0 0
        %1370 = vmatprep.subr.bf16.mxu0 0
        %1371 = vmatpush2.bf16.xpose.msra.mxu0 0
        %1372 = vmatprep.subr.bf16.mxu0 0
        %1373 = vmatpush2.bf16.xpose.msra.mxu0 0
        %1374 = vmatprep.subr.bf16.mxu0 0
        %1375 = vmatpush2.bf16.xpose.msra.mxu0 0
        %1376 = vmatprep.subr.bf16.mxu0 0
        %1377 = vmatpush2.bf16.xpose.msra.mxu0 0
        %1378 = vmatprep.subr.bf16.mxu0 0
        %1379 = vmatpush2.bf16.xpose.msra.mxu0 0
        %1380 = vmatprep.subr.bf16.mxu0 0
        %1381 = vmatpush2.bf16.xpose.msra.mxu0 0
        %1382 = vmatprep.mubr.bf16.mxu0 0
        %1383 = vmatmul.mubr.bf16.gmra.mxu0 %v1345
        %v1384 = vpop.f32.mrf.mxu0
        %v1385 = vadd.f32 0.0, %v1384
        %v1386 = vpop.f32.mrf.mxu0
        %v1387 = vpop.f32.mrf.mxu0
        %v1388 = vpop.f32.mrf.mxu0
        %1389 = vdwg.mxu0
        %v1390 = vlaneseq
        %v1391 = vand.u32 %v1390, 127
        %v1392 = vstv %s666
        %vm1393 = vcmp.lt.s32.totalorder %v1391, %v1392
        %v1394 = vsel %vm1393, %v1247, -1000000.0
        %v1395 = vsel %vm1393, %v1293, -1000000.0
        %v1396 = vsel %vm1393, %v1339, -1000000.0
        %v1397 = vsel %vm1393, %v1385, -1000000.0
        %v1398 = vsel %vm1205, %v1394, -inf
        %1399 = vmax.xlane.f32.xlu0 %v1398
        %v1400 = vpop.xlane.xlu0 %1399
        %v1401 = vsel %vm1205, %v1395, -inf
        %1402 = vmax.xlane.f32.xlu0 %v1401
        %v1403 = vpop.xlane.xlu0 %1402
        %v1404 = vsel %vm1205, %v1396, -inf
        %1405 = vmax.xlane.f32.xlu0 %v1404
        %v1406 = vpop.xlane.xlu0 %1405
        %v1407 = vsel %vm1205, %v1397, -inf
        %1408 = vmax.xlane.f32.xlu0 %v1407
        %v1409 = vpop.xlane.xlu0 %1408
        %v1410 = vsub.f32 %v1394, %v1400
        %v1411 = vsub.f32 %v1395, %v1403
        %v1412 = vsub.f32 %v1396, %v1406
        %v1413 = vsub.f32 %v1397, %v1409
        %v1414 = vmul.f32 %v1410, 1.442695
        %v1415 = vpow.pop %v1414
        %v1416 = vmul.f32 %v1411, 1.442695
        %v1417 = vpow.pop %v1416
        %v1418 = vmul.f32 %v1412, 1.442695
        %v1419 = vpow.pop %v1418
        %v1420 = vmul.f32 %v1413, 1.442695
        %v1421 = vpow.pop %v1420
        %v1422 = vsel %vm1205, %v1415, 0.0
        %1423 = vadd.xlane.f32.xlu0 %v1422
        %v1424 = vpop.xlane.xlu0 %1423
        %v1425 = vsel %vm1205, %v1417, 0.0
        %1426 = vadd.xlane.f32.xlu0 %v1425
        %v1427 = vpop.xlane.xlu0 %1426
        %v1428 = vsel %vm1205, %v1419, 0.0
        %1429 = vadd.xlane.f32.xlu0 %v1428
        %v1430 = vpop.xlane.xlu0 %1429
        %v1431 = vsel %vm1205, %v1421, 0.0
        %1432 = vadd.xlane.f32.xlu0 %v1431
        %v1433 = vpop.xlane.xlu0 %1432
        %v1434 = vrcp.pop %v1424
        %v1435 = vrcp.pop %v1427
        %v1436 = vrcp.pop %v1430
        %v1437 = vrcp.pop %v1433
        %v1438 = vmul.f32 %v1415, %v1434
        %v1439 = vmul.f32 %v1417, %v1435
        %v1440 = vmul.f32 %v1419, %v1436
        %v1441 = vmul.f32 %v1421, %v1437
        %v1442 = vpack.c.bf16 %v1438, %v1438
        %v1443 = vpack.c.bf16 %v1439, %v1439
        %v1444 = vpack.c.bf16 %v1440, %v1440
        %v1445 = vpack.c.bf16 %v1441, %v1441
        %v1447 = vsel %vm1205, %v1442, 0
        %vm1449 = vcmask 1043456
        %v1451 = vsel %vm1449, %v1201, 0
        %1453 = vmatprep.subr.bf16.mxu0 0
        %1454 = vmatpush1.bf16.msra.mxu0 0
        %1455 = vmatprep.subr.bf16.mxu0 0
        %1456 = vmatpush1.bf16.msra.mxu0 0
        %1457 = vmatprep.subr.bf16.mxu0 0
        %1458 = vmatpush1.bf16.msra.mxu0 0
        %1459 = vmatprep.subr.bf16.mxu0 0
        %1460 = vmatpush1.bf16.msra.mxu0 0
        %1461 = vmatprep.subr.bf16.mxu0 0
        %1462 = vmatpush1.bf16.msra.mxu0 0
        %1463 = vmatprep.subr.bf16.mxu0 0
        %1464 = vmatpush1.bf16.msra.mxu0 0
        %1465 = vmatprep.subr.bf16.mxu0 0
        %1466 = vmatpush1.bf16.msra.mxu0 0
        %1467 = vmatprep.subr.bf16.mxu0 0
        %1468 = vmatpush1.bf16.msra.mxu0 %v1451
        %1469 = vmatprep.subr.bf16.mxu0 0
        %1470 = vmatpush2.bf16.msra.mxu0 0
        %1471 = vmatprep.subr.bf16.mxu0 0
        %1472 = vmatpush2.bf16.msra.mxu0 0
        %1473 = vmatprep.subr.bf16.mxu0 0
        %1474 = vmatpush2.bf16.msra.mxu0 0
        %1475 = vmatprep.subr.bf16.mxu0 0
        %1476 = vmatpush2.bf16.msra.mxu0 0
        %1477 = vmatprep.subr.bf16.mxu0 0
        %1478 = vmatpush2.bf16.msra.mxu0 0
        %1479 = vmatprep.subr.bf16.mxu0 0
        %1480 = vmatpush2.bf16.msra.mxu0 0
        %1481 = vmatprep.subr.bf16.mxu0 0
        %1482 = vmatpush2.bf16.msra.mxu0 0
        %1483 = vmatprep.subr.bf16.mxu0 0
        %1484 = vmatpush2.bf16.msra.mxu0 0
        %1485 = vmatprep.mubr.bf16.mxu0 0
        %1486 = vmatmul.mubr.bf16.gmra.mxu0 %v1447
        %v1487 = vpop.f32.mrf.mxu0
        %v1488 = vadd.f32 0.0, %v1487
        %v1489 = vpop.f32.mrf.mxu0
        %v1490 = vpop.f32.mrf.mxu0
        %v1491 = vpop.f32.mrf.mxu0
        %1492 = vdwg.mxu0
        %v1494 = vsel %vm1205, %v1443, 0
        %v1497 = vsel %vm1449, %v1202, 0
        %1499 = vmatprep.subr.bf16.mxu0 0
        %1500 = vmatpush1.bf16.msra.mxu0 0
        %1501 = vmatprep.subr.bf16.mxu0 0
        %1502 = vmatpush1.bf16.msra.mxu0 0
        %1503 = vmatprep.subr.bf16.mxu0 0
        %1504 = vmatpush1.bf16.msra.mxu0 0
        %1505 = vmatprep.subr.bf16.mxu0 0
        %1506 = vmatpush1.bf16.msra.mxu0 0
        %1507 = vmatprep.subr.bf16.mxu0 0
        %1508 = vmatpush1.bf16.msra.mxu0 0
        %1509 = vmatprep.subr.bf16.mxu0 0
        %1510 = vmatpush1.bf16.msra.mxu0 0
        %1511 = vmatprep.subr.bf16.mxu0 0
        %1512 = vmatpush1.bf16.msra.mxu0 0
        %1513 = vmatprep.subr.bf16.mxu0 0
        %1514 = vmatpush1.bf16.msra.mxu0 %v1497
        %1515 = vmatprep.subr.bf16.mxu0 0
        %1516 = vmatpush2.bf16.msra.mxu0 0
        %1517 = vmatprep.subr.bf16.mxu0 0
        %1518 = vmatpush2.bf16.msra.mxu0 0
        %1519 = vmatprep.subr.bf16.mxu0 0
        %1520 = vmatpush2.bf16.msra.mxu0 0
        %1521 = vmatprep.subr.bf16.mxu0 0
        %1522 = vmatpush2.bf16.msra.mxu0 0
        %1523 = vmatprep.subr.bf16.mxu0 0
        %1524 = vmatpush2.bf16.msra.mxu0 0
        %1525 = vmatprep.subr.bf16.mxu0 0
        %1526 = vmatpush2.bf16.msra.mxu0 0
        %1527 = vmatprep.subr.bf16.mxu0 0
        %1528 = vmatpush2.bf16.msra.mxu0 0
        %1529 = vmatprep.subr.bf16.mxu0 0
        %1530 = vmatpush2.bf16.msra.mxu0 0
        %1531 = vmatprep.mubr.bf16.mxu0 0
        %1532 = vmatmul.mubr.bf16.gmra.mxu0 %v1494
        %v1533 = vpop.f32.mrf.mxu0
        %v1534 = vadd.f32 0.0, %v1533
        %v1535 = vpop.f32.mrf.mxu0
        %v1536 = vpop.f32.mrf.mxu0
        %v1537 = vpop.f32.mrf.mxu0
        %1538 = vdwg.mxu0
        %v1540 = vsel %vm1205, %v1444, 0
        %v1543 = vsel %vm1449, %v1203, 0
        %1545 = vmatprep.subr.bf16.mxu0 0
        %1546 = vmatpush1.bf16.msra.mxu0 0
        %1547 = vmatprep.subr.bf16.mxu0 0
        %1548 = vmatpush1.bf16.msra.mxu0 0
        %1549 = vmatprep.subr.bf16.mxu0 0
        %1550 = vmatpush1.bf16.msra.mxu0 0
        %1551 = vmatprep.subr.bf16.mxu0 0
        %1552 = vmatpush1.bf16.msra.mxu0 0
        %1553 = vmatprep.subr.bf16.mxu0 0
        %1554 = vmatpush1.bf16.msra.mxu0 0
        %1555 = vmatprep.subr.bf16.mxu0 0
        %1556 = vmatpush1.bf16.msra.mxu0 0
        %1557 = vmatprep.subr.bf16.mxu0 0
        %1558 = vmatpush1.bf16.msra.mxu0 0
        %1559 = vmatprep.subr.bf16.mxu0 0
        %1560 = vmatpush1.bf16.msra.mxu0 %v1543
        %1561 = vmatprep.subr.bf16.mxu0 0
        %1562 = vmatpush2.bf16.msra.mxu0 0
        %1563 = vmatprep.subr.bf16.mxu0 0
        %1564 = vmatpush2.bf16.msra.mxu0 0
        %1565 = vmatprep.subr.bf16.mxu0 0
        %1566 = vmatpush2.bf16.msra.mxu0 0
        %1567 = vmatprep.subr.bf16.mxu0 0
        %1568 = vmatpush2.bf16.msra.mxu0 0
        %1569 = vmatprep.subr.bf16.mxu0 0
        %1570 = vmatpush2.bf16.msra.mxu0 0
        %1571 = vmatprep.subr.bf16.mxu0 0
        %1572 = vmatpush2.bf16.msra.mxu0 0
        %1573 = vmatprep.subr.bf16.mxu0 0
        %1574 = vmatpush2.bf16.msra.mxu0 0
        %1575 = vmatprep.subr.bf16.mxu0 0
        %1576 = vmatpush2.bf16.msra.mxu0 0
        %1577 = vmatprep.mubr.bf16.mxu0 0
        %1578 = vmatmul.mubr.bf16.gmra.mxu0 %v1540
        %v1579 = vpop.f32.mrf.mxu0
        %v1580 = vadd.f32 0.0, %v1579
        %v1581 = vpop.f32.mrf.mxu0
        %v1582 = vpop.f32.mrf.mxu0
        %v1583 = vpop.f32.mrf.mxu0
        %1584 = vdwg.mxu0
        %v1586 = vsel %vm1205, %v1445, 0
        %v1589 = vsel %vm1449, %v1204, 0
        %1591 = vmatprep.subr.bf16.mxu0 0
        %1592 = vmatpush1.bf16.msra.mxu0 0
        %1593 = vmatprep.subr.bf16.mxu0 0
        %1594 = vmatpush1.bf16.msra.mxu0 0
        %1595 = vmatprep.subr.bf16.mxu0 0
        %1596 = vmatpush1.bf16.msra.mxu0 0
        %1597 = vmatprep.subr.bf16.mxu0 0
        %1598 = vmatpush1.bf16.msra.mxu0 0
        %1599 = vmatprep.subr.bf16.mxu0 0
        %1600 = vmatpush1.bf16.msra.mxu0 0
        %1601 = vmatprep.subr.bf16.mxu0 0
        %1602 = vmatpush1.bf16.msra.mxu0 0
        %1603 = vmatprep.subr.bf16.mxu0 0
        %1604 = vmatpush1.bf16.msra.mxu0 0
        %1605 = vmatprep.subr.bf16.mxu0 0
        %1606 = vmatpush1.bf16.msra.mxu0 %v1589
        %1607 = vmatprep.subr.bf16.mxu0 0
        %1608 = vmatpush2.bf16.msra.mxu0 0
        %1609 = vmatprep.subr.bf16.mxu0 0
        %1610 = vmatpush2.bf16.msra.mxu0 0
        %1611 = vmatprep.subr.bf16.mxu0 0
        %1612 = vmatpush2.bf16.msra.mxu0 0
        %1613 = vmatprep.subr.bf16.mxu0 0
        %1614 = vmatpush2.bf16.msra.mxu0 0
        %1615 = vmatprep.subr.bf16.mxu0 0
        %1616 = vmatpush2.bf16.msra.mxu0 0
        %1617 = vmatprep.subr.bf16.mxu0 0
        %1618 = vmatpush2.bf16.msra.mxu0 0
        %1619 = vmatprep.subr.bf16.mxu0 0
        %1620 = vmatpush2.bf16.msra.mxu0 0
        %1621 = vmatprep.subr.bf16.mxu0 0
        %1622 = vmatpush2.bf16.msra.mxu0 0
        %1623 = vmatprep.mubr.bf16.mxu0 0
        %1624 = vmatmul.mubr.bf16.gmra.mxu0 %v1586
        %v1625 = vpop.f32.mrf.mxu0
        %v1626 = vadd.f32 0.0, %v1625
        %v1627 = vpop.f32.mrf.mxu0
        %v1628 = vpop.f32.mrf.mxu0
        %v1629 = vpop.f32.mrf.mxu0
        %1630 = vdwg.mxu0
        %v1631 = vcombine.low %v1488, %v1580
        %v1632 = vcombine.high %v1488, %v1580
        %v1634 = vunpack.c.l.s4 1983009808
        %v1635 = vunpack.c.0.s8 %v1634
        %v1636 = vlaneseq
        %v1637 = vshrl.u32 %v1636, 7
        %v1638 = vsub.s32 %v1635, %v1637
        %v1639 = vrot.slane %v1631, %v1638
        %v1641 = vunpack.c.l.s4 1983009808
        %v1642 = vunpack.c.0.s8 %v1641
        %v1643 = vlaneseq
        %v1644 = vshrl.u32 %v1643, 7
        %v1645 = vsub.s32 %v1642, %v1644
        %v1646 = vrot.slane %v1632, %v1645
        %v1647 = vcombine.low %v1534, %v1626
        %v1648 = vcombine.high %v1534, %v1626
        %v1650 = vunpack.c.l.s4 1983009808
        %v1651 = vunpack.c.0.s8 %v1650
        %v1652 = vlaneseq
        %v1653 = vshrl.u32 %v1652, 7
        %v1654 = vsub.s32 %v1651, %v1653
        %v1655 = vrot.slane %v1647, %v1654
        %v1657 = vunpack.c.l.s4 1983009808
        %v1658 = vunpack.c.0.s8 %v1657
        %v1659 = vlaneseq
        %v1660 = vshrl.u32 %v1659, 7
        %v1661 = vsub.s32 %v1658, %v1660
        %v1662 = vrot.slane %v1648, %v1661
        %v1663 = vcombine.low %v1639, %v1655
        %v1664 = vcombine.high %v1639, %v1655
        %v1666 = vunpack.c.l.s4 1934713408
        %v1667 = vunpack.c.0.s8 %v1666
        %v1668 = vlaneseq
        %v1669 = vshrl.u32 %v1668, 7
        %v1670 = vsub.s32 %v1667, %v1669
        %v1671 = vrot.slane %v1663, %v1670
        %v1673 = vunpack.c.l.s4 1934713408
        %v1674 = vunpack.c.0.s8 %v1673
        %v1675 = vlaneseq
        %v1676 = vshrl.u32 %v1675, 7
        %v1677 = vsub.s32 %v1674, %v1676
        %v1678 = vrot.slane %v1664, %v1677
        %v1679 = vcombine.low %v1646, %v1662
        %v1680 = vcombine.high %v1646, %v1662
        %v1682 = vunpack.c.l.s4 1934713408
        %v1683 = vunpack.c.0.s8 %v1682
        %v1684 = vlaneseq
        %v1685 = vshrl.u32 %v1684, 7
        %v1686 = vsub.s32 %v1683, %v1685
        %v1687 = vrot.slane %v1679, %v1686
        %v1689 = vunpack.c.l.s4 1934713408
        %v1690 = vunpack.c.0.s8 %v1689
        %v1691 = vlaneseq
        %v1692 = vshrl.u32 %v1691, 7
        %v1693 = vsub.s32 %v1690, %v1692
        %v1694 = vrot.slane %v1680, %v1693
        %v1695 = vcombine.high %v1671, 0.0
        %v1696 = vcombine.high %v1678, 0.0
        %v1697 = vcombine.high %v1687, 0.0
        %v1698 = vcombine.high %v1694, 0.0
        %v1699 = vcombine.low %v1671, %v1678
        %v1701 = vunpack.c.l.s4 1983009808
        %v1702 = vunpack.c.0.s8 %v1701
        %v1703 = vlaneseq
        %v1704 = vshrl.u32 %v1703, 7
        %v1705 = vsub.s32 %v1702, %v1704
        %v1706 = vrot.slane %v1699, %v1705
        %v1707 = vcombine.low %v1695, %v1696
        %v1709 = vunpack.c.l.s4 1983009808
        %v1710 = vunpack.c.0.s8 %v1709
        %v1711 = vlaneseq
        %v1712 = vshrl.u32 %v1711, 7
        %v1713 = vsub.s32 %v1710, %v1712
        %v1714 = vrot.slane %v1707, %v1713
        %v1715 = vcombine.low %v1687, %v1694
        %v1717 = vunpack.c.l.s4 1983009808
        %v1718 = vunpack.c.0.s8 %v1717
        %v1719 = vlaneseq
        %v1720 = vshrl.u32 %v1719, 7
        %v1721 = vsub.s32 %v1718, %v1720
        %v1722 = vrot.slane %v1715, %v1721
        %v1723 = vcombine.low %v1697, %v1698
        %v1725 = vunpack.c.l.s4 1983009808
        %v1726 = vunpack.c.0.s8 %v1725
        %v1727 = vlaneseq
        %v1728 = vshrl.u32 %v1727, 7
        %v1729 = vsub.s32 %v1726, %v1728
        %v1730 = vrot.slane %v1723, %v1729
        %v1731 = vcombine.low %v1706, %v1714
        %v1732 = vcombine.high %v1706, %v1714
        %v1734 = vunpack.c.l.s4 1934713408
        %v1735 = vunpack.c.0.s8 %v1734
        %v1736 = vlaneseq
        %v1737 = vshrl.u32 %v1736, 7
        %v1738 = vsub.s32 %v1735, %v1737
        %v1739 = vrot.slane %v1731, %v1738
        %v1741 = vunpack.c.l.s4 1934713408
        %v1742 = vunpack.c.0.s8 %v1741
        %v1743 = vlaneseq
        %v1744 = vshrl.u32 %v1743, 7
        %v1745 = vsub.s32 %v1742, %v1744
        %v1746 = vrot.slane %v1732, %v1745
        %v1747 = vcombine.low %v1722, %v1730
        %v1748 = vcombine.high %v1722, %v1730
        %v1750 = vunpack.c.l.s4 1934713408
        %v1751 = vunpack.c.0.s8 %v1750
        %v1752 = vlaneseq
        %v1753 = vshrl.u32 %v1752, 7
        %v1754 = vsub.s32 %v1751, %v1753
        %v1755 = vrot.slane %v1747, %v1754
        %v1757 = vunpack.c.l.s4 1934713408
        %v1758 = vunpack.c.0.s8 %v1757
        %v1759 = vlaneseq
        %v1760 = vshrl.u32 %v1759, 7
        %v1761 = vsub.s32 %v1758, %v1760
        %v1762 = vrot.slane %v1748, %v1761
        %v1763 = vcombine.low %v1739, %v1755
        %v1764 = vcombine.high %v1739, %v1755
        %v1765 = vcombine.low %v1746, %v1762
        %v1766 = vcombine.high %v1746, %v1762
        %1768 = vrot.lane.b32.xlu0 %v1764, 8
        %v1769 = vpop.permute.xlu0 %1768
        %1772 = vrot.lane.b32.xlu0 %v1765, 16
        %v1773 = vpop.permute.xlu0 %1772
        %1776 = vrot.lane.b32.xlu0 %v1766, 24
        %v1777 = vpop.permute.xlu0 %1776
        %v1779 = vsel %vm1205, %v1763, %v1769
        %vm1780 = vcmask 130048
        %v1781 = vsel %vm1780, %v1779, %v1773
        %vm1782 = vcmask 195584
        %v1783 = vsel %vm1782, %v1781, %v1777
        %v1784 = vpack.c.bf16 %v1783, %v1783
        %v1785 = vld [vmem:[%s633] sm:$0xf]
        %v1786 = vld [vmem:[%s633 + $0x4] sm:$0xf]
        %v1787 = vld [vmem:[%s633 + $0x8] sm:$0xf]
        %v1788 = vld [vmem:[%s633 + $0xc] sm:$0xf]
        %v1789 = vld [vmem:[%s636] sm:$0x1]
        %v1791 = vlaneseq
        %v1792 = vshrl.u32 %v1791, 7
        %v1793 = vsub.s32 0, %v1792
        %v1794 = vrot.slane %v1789, %v1793
        %v1800 = vunpack.c.l.b16 %v1785
        %v1801 = vunpack.c.l.b16 %v1786
        %v1802 = vunpack.c.l.b16 %v1787
        %v1803 = vunpack.c.l.b16 %v1788
        %v1804 = vpack.c.b16 %v1801, %v1800
        %v1805 = vpack.c.b16 %v1803, %v1802
        %v1809 = vsel %vm699, %v1784, 0
        %1811 = vmatprep.subr.bf16.mxu0 0
        %1812 = vmatpush1.bf16.msra.mxu0 0
        %1813 = vmatprep.subr.bf16.mxu0 0
        %1814 = vmatpush1.bf16.msra.mxu0 0
        %1815 = vmatprep.subr.bf16.mxu0 0
        %1816 = vmatpush1.bf16.msra.mxu0 0
        %1817 = vmatprep.subr.bf16.mxu0 0
        %1818 = vmatpush1.bf16.msra.mxu0 0
        %1819 = vmatprep.subr.bf16.mxu0 0
        %1820 = vmatpush1.bf16.msra.mxu0 0
        %1821 = vmatprep.subr.bf16.mxu0 0
        %1822 = vmatpush1.bf16.msra.mxu0 0
        %1823 = vmatprep.subr.bf16.mxu0 0
        %1824 = vmatpush1.bf16.msra.mxu0 %v1805
        %1825 = vmatprep.subr.bf16.mxu0 0
        %1826 = vmatpush1.bf16.msra.mxu0 %v1804
        %1827 = vmatprep.subr.bf16.mxu0 0
        %1828 = vmatpush2.bf16.msra.mxu0 0
        %1829 = vmatprep.subr.bf16.mxu0 0
        %1830 = vmatpush2.bf16.msra.mxu0 0
        %1831 = vmatprep.subr.bf16.mxu0 0
        %1832 = vmatpush2.bf16.msra.mxu0 0
        %1833 = vmatprep.subr.bf16.mxu0 0
        %1834 = vmatpush2.bf16.msra.mxu0 0
        %1835 = vmatprep.subr.bf16.mxu0 0
        %1836 = vmatpush2.bf16.msra.mxu0 0
        %1837 = vmatprep.subr.bf16.mxu0 0
        %1838 = vmatpush2.bf16.msra.mxu0 0
        %1839 = vmatprep.subr.bf16.mxu0 0
        %1840 = vmatpush2.bf16.msra.mxu0 0
        %1841 = vmatprep.subr.bf16.mxu0 0
        %1842 = vmatpush2.bf16.msra.mxu0 0
        %1843 = vmatprep.mubr.bf16.mxu0 0
        %1844 = vmatmul.mubr.bf16.gmra.mxu0 %v1809
        %v1845 = vpop.f32.mrf.mxu0
        %v1846 = vadd.f32 %v1794, %v1845
        %v1847 = vpop.f32.mrf.mxu0
        %v1848 = vpop.f32.mrf.mxu0
        %v1849 = vpop.f32.mrf.mxu0
        %1850 = vdwg.mxu0
        %v1851 = vadd.f32 %v674, %v1846
        %v1852 = vld [vmem:[%s639] sm:$0x1]
        %v1853 = vld [vmem:[%s642] sm:$0x1]
        %v1854 = vsel %vm699, %v1851, 0.0
        %1855 = vadd.xlane.f32.xlu0 %v1854
        %v1856 = vpop.xlane.xlu0 %1855
        %v1857 = vrcp.pop 32.0
        %v1858 = vmul.f32 %v1856, %v1857
        %v1859 = vsub.f32 %v1851, %v1858
        %v1860 = vmul.f32 %v1859, %v1859
        %v1861 = vsel %vm699, %v1860, 0.0
        %1862 = vadd.xlane.f32.xlu0 %v1861
        %v1863 = vpop.xlane.xlu0 %1862
        %v1864 = vmul.f32 %v1863, %v1857
        %v1865 = vadd.f32 %v1864, 1e-05
        %v1866 = vrsqrt.pop %v1865
        %v1867 = vmul.f32 %v1859, %v1866
        %v1869 = vlaneseq
        %v1870 = vshrl.u32 %v1869, 7
        %v1871 = vsub.s32 0, %v1870
        %v1872 = vrot.slane %v1852, %v1871
        %v1874 = vmul.f32 %v1867, %v1872
        %v1876 = vlaneseq
        %v1877 = vshrl.u32 %v1876, 7
        %v1878 = vsub.s32 0, %v1877
        %v1879 = vrot.slane %v1853, %v1878
        %v1881 = vadd.f32 %v1874, %v1879
        %v1882 = vpack.c.bf16 %v1881, %v1881
        %v1883 = vld [vmem:[%s647] sm:$0xf]
        %v1884 = vld [vmem:[%s647 + $0x4] sm:$0xf]
        %v1885 = vld [vmem:[%s647 + $0x8] sm:$0xf]
        %v1886 = vld [vmem:[%s647 + $0xc] sm:$0xf]
        %v1887 = vld [vmem:[%s650] sm:$0x1]
        %v1889 = vlaneseq
        %v1890 = vshrl.u32 %v1889, 7
        %v1891 = vsub.s32 0, %v1890
        %v1892 = vrot.slane %v1887, %v1891
        %v1898 = vunpack.c.l.b16 %v1883
        %v1899 = vunpack.c.l.b16 %v1884
        %v1900 = vunpack.c.l.b16 %v1885
        %v1901 = vunpack.c.l.b16 %v1886
        %v1902 = vpack.c.b16 %v1899, %v1898
        %v1903 = vpack.c.b16 %v1901, %v1900
        %v1907 = vsel %vm699, %v1882, 0
        %1909 = vmatprep.subr.bf16.mxu0 0
        %1910 = vmatpush1.bf16.msra.mxu0 0
        %1911 = vmatprep.subr.bf16.mxu0 0
        %1912 = vmatpush1.bf16.msra.mxu0 0
        %1913 = vmatprep.subr.bf16.mxu0 0
        %1914 = vmatpush1.bf16.msra.mxu0 0
        %1915 = vmatprep.subr.bf16.mxu0 0
        %1916 = vmatpush1.bf16.msra.mxu0 0
        %1917 = vmatprep.subr.bf16.mxu0 0
        %1918 = vmatpush1.bf16.msra.mxu0 0
        %1919 = vmatprep.subr.bf16.mxu0 0
        %1920 = vmatpush1.bf16.msra.mxu0 0
        %1921 = vmatprep.subr.bf16.mxu0 0
        %1922 = vmatpush1.bf16.msra.mxu0 %v1903
        %1923 = vmatprep.subr.bf16.mxu0 0
        %1924 = vmatpush1.bf16.msra.mxu0 %v1902
        %1925 = vmatprep.subr.bf16.mxu0 0
        %1926 = vmatpush2.bf16.msra.mxu0 0
        %1927 = vmatprep.subr.bf16.mxu0 0
        %1928 = vmatpush2.bf16.msra.mxu0 0
        %1929 = vmatprep.subr.bf16.mxu0 0
        %1930 = vmatpush2.bf16.msra.mxu0 0
        %1931 = vmatprep.subr.bf16.mxu0 0
        %1932 = vmatpush2.bf16.msra.mxu0 0
        %1933 = vmatprep.subr.bf16.mxu0 0
        %1934 = vmatpush2.bf16.msra.mxu0 0
        %1935 = vmatprep.subr.bf16.mxu0 0
        %1936 = vmatpush2.bf16.msra.mxu0 0
        %1937 = vmatprep.subr.bf16.mxu0 0
        %1938 = vmatpush2.bf16.msra.mxu0 0
        %1939 = vmatprep.subr.bf16.mxu0 0
        %1940 = vmatpush2.bf16.msra.mxu0 0
        %1941 = vmatprep.mubr.bf16.mxu0 0
        %1942 = vmatmul.mubr.bf16.gmra.mxu0 %v1907
        %v1943 = vpop.f32.mrf.mxu0
        %v1944 = vadd.f32 %v1892, %v1943
        %v1945 = vpop.f32.mrf.mxu0
        %v1946 = vpop.f32.mrf.mxu0
        %v1947 = vpop.f32.mrf.mxu0
        %1948 = vdwg.mxu0
        %v1949 = vmax.f32 %v1944, 0.0
        %v1950 = vpack.c.bf16 %v1949, %v1949
        %v1951 = vld [vmem:[%s655] sm:$0xf]
        %v1952 = vld [vmem:[%s655 + $0x4] sm:$0xf]
        %v1953 = vld [vmem:[%s655 + $0x8] sm:$0xf]
        %v1954 = vld [vmem:[%s655 + $0xc] sm:$0xf]
        %v1955 = vld [vmem:[%s655 + $0x10] sm:$0xf]
        %v1956 = vld [vmem:[%s655 + $0x14] sm:$0xf]
        %v1957 = vld [vmem:[%s655 + $0x18] sm:$0xf]
        %v1958 = vld [vmem:[%s655 + $0x1c] sm:$0xf]
        %v1959 = vld [vmem:[%s658] sm:$0x1]
        %v1961 = vlaneseq
        %v1962 = vshrl.u32 %v1961, 7
        %v1963 = vsub.s32 0, %v1962
        %v1964 = vrot.slane %v1959, %v1963
        %v1974 = vunpack.c.l.b16 %v1951
        %v1975 = vunpack.c.l.b16 %v1952
        %v1976 = vunpack.c.l.b16 %v1953
        %v1977 = vunpack.c.l.b16 %v1954
        %v1978 = vunpack.c.l.b16 %v1955
        %v1979 = vunpack.c.l.b16 %v1956
        %v1980 = vunpack.c.l.b16 %v1957
        %v1981 = vunpack.c.l.b16 %v1958
        %v1982 = vpack.c.b16 %v1975, %v1974
        %v1983 = vpack.c.b16 %v1977, %v1976
        %v1984 = vpack.c.b16 %v1979, %v1978
        %v1985 = vpack.c.b16 %v1981, %v1980
        %vm1990 = vcmask 523264
        %v1992 = vsel %vm1990, %v1950, 0
        %1994 = vmatprep.subr.bf16.mxu0 0
        %1995 = vmatpush1.bf16.msra.mxu0 0
        %1996 = vmatprep.subr.bf16.mxu0 0
        %1997 = vmatpush1.bf16.msra.mxu0 0
        %1998 = vmatprep.subr.bf16.mxu0 0
        %1999 = vmatpush1.bf16.msra.mxu0 0
        %2000 = vmatprep.subr.bf16.mxu0 0
        %2001 = vmatpush1.bf16.msra.mxu0 0
        %2002 = vmatprep.subr.bf16.mxu0 0
        %2003 = vmatpush1.bf16.msra.mxu0 %v1985
        %2004 = vmatprep.subr.bf16.mxu0 0
        %2005 = vmatpush1.bf16.msra.mxu0 %v1984
        %2006 = vmatprep.subr.bf16.mxu0 0
        %2007 = vmatpush1.bf16.msra.mxu0 %v1983
        %2008 = vmatprep.subr.bf16.mxu0 0
        %2009 = vmatpush1.bf16.msra.mxu0 %v1982
        %2010 = vmatprep.subr.bf16.mxu0 0
        %2011 = vmatpush2.bf16.msra.mxu0 0
        %2012 = vmatprep.subr.bf16.mxu0 0
        %2013 = vmatpush2.bf16.msra.mxu0 0
        %2014 = vmatprep.subr.bf16.mxu0 0
        %2015 = vmatpush2.bf16.msra.mxu0 0
        %2016 = vmatprep.subr.bf16.mxu0 0
        %2017 = vmatpush2.bf16.msra.mxu0 0
        %2018 = vmatprep.subr.bf16.mxu0 0
        %2019 = vmatpush2.bf16.msra.mxu0 0
        %2020 = vmatprep.subr.bf16.mxu0 0
        %2021 = vmatpush2.bf16.msra.mxu0 0
        %2022 = vmatprep.subr.bf16.mxu0 0
        %2023 = vmatpush2.bf16.msra.mxu0 0
        %2024 = vmatprep.subr.bf16.mxu0 0
        %2025 = vmatpush2.bf16.msra.mxu0 0
        %2026 = vmatprep.mubr.bf16.mxu0 0
        %2027 = vmatmul.mubr.bf16.gmra.mxu0 %v1992
        %v2028 = vpop.f32.mrf.mxu0
        %v2029 = vadd.f32 %v1964, %v2028
        %v2030 = vpop.f32.mrf.mxu0
        %v2031 = vpop.f32.mrf.mxu0
        %v2032 = vpop.f32.mrf.mxu0
        %2033 = vdwg.mxu0
        %v2034 = vadd.f32 %v1881, %v2029
        %v2035 = vld [vmem:[%s661] sm:$0x1]
        %v2036 = vld [vmem:[%s664] sm:$0x1]
        %v2037 = vsel %vm699, %v2034, 0.0
        %2038 = vadd.xlane.f32.xlu0 %v2037
        %v2039 = vpop.xlane.xlu0 %2038
        %v2040 = vmul.f32 %v2039, %v1857
        %v2041 = vsub.f32 %v2034, %v2040
        %v2042 = vmul.f32 %v2041, %v2041
        %v2043 = vsel %vm699, %v2042, 0.0
        %2044 = vadd.xlane.f32.xlu0 %v2043
        %v2045 = vpop.xlane.xlu0 %2044
        %v2046 = vmul.f32 %v2045, %v1857
        %v2047 = vadd.f32 %v2046, 1e-05
        %v2048 = vrsqrt.pop %v2047
        %v2049 = vmul.f32 %v2041, %v2048
        %v2051 = vlaneseq
        %v2052 = vshrl.u32 %v2051, 7
        %v2053 = vsub.s32 0, %v2052
        %v2054 = vrot.slane %v2035, %v2053
        %v2056 = vmul.f32 %v2049, %v2054
        %v2058 = vlaneseq
        %v2059 = vshrl.u32 %v2058, 7
        %v2060 = vsub.s32 0, %v2059
        %v2061 = vrot.slane %v2036, %v2060
        %v2063 = vadd.f32 %v2056, %v2061
        %2064 = vst.msk [vmem:[#allocation2] sm:$0xff] %vm699, %v2063
        %p2065 = scmp.eq.s32.totalorder %s40, 1
        // Predicated region
        $region81: #{tpu_custom_call.1} parent=71 // pred_check
          %p2066 = pneg %p2065
        $region82: #{tpu_custom_call.1} parent=71 // pred_check_branch
          %2068 = sbr.rel (%p2066) target = $region84
        $region83: #{tpu_custom_call.1} parent=71 // pred_region
          %2069 = vst.msk [vmem:[%s620] sm:$0xff] %vm699, %v2063
        $region84: #{tpu_custom_call.1} parent=71 // pred_fallthru
          _
        %s2070 = sand.u32 %s393, 1
        %s2071 = scalar_lea.sflag [#allocation7], %s2070
        %s2072 = sand.u32 %s393, 1
        %s2073 = smul.addr %s2072, 8
        %s2074 = scalar_lea.vmem [#allocation8], %s2073
        // Predicated region
        $region85: #{tpu_custom_call.1} parent=71 // pred_check
          %p2075 = pneg %p403
        $region86: #{tpu_custom_call.1} parent=71 // pred_check_branch
          %2077 = sbr.rel (%p2075) target = $region88
        $region87: #{tpu_custom_call.1} parent=71 // pred_region
          %s2079 = ssub.s32 128, 128
          %2080 = vsyncadd %s2071, %s2079
          %s2081 = smul.addr %s39, 128
          %s2082 = scalar_lea.hbm %s14, %s2081
          %s2084 = sshll.u32 %s2074, 4
          %s2085 = int_to_ptr.vmem [resolvable:$true] %s2084
          %2087 = dma.vmem_to_hbm [thread:$0]  %s2085, 128, %s2082, %s2071
        $region88: #{tpu_custom_call.1} parent=71 // pred_fallthru
          _
      $region72: #{tpu_custom_call.1} parent=5 // pred_fallthru
        _
      %p2088 = scmp.le.s32.totalorder 2, %s30
      // Predicated region
      $region89: #{tpu_custom_call.1} parent=5 // pred_check
        %p2089 = pneg %p2088
      $region90: #{tpu_custom_call.1} parent=5 // pred_check_branch
        %2091 = sbr.rel (%p2089) target = $region92
      $region91: #{tpu_custom_call.1} parent=5 // pred_region
        %s2092 = ssub.s32 %s30, 2
        // Predicated region
        $region93: #{tpu_custom_call.1} parent=91 // pred_check
          %p2093 = pneg %p409
        $region94: #{tpu_custom_call.1} parent=91 // pred_check_branch
          %2095 = sbr.rel (%p2093) target = $region96
        $region95: #{tpu_custom_call.1} parent=91 // pred_region
          %s2096 = sand.u32 %s394, 1
          %s2097 = scalar_lea.sflag [#allocation7], %s2096
          %s2098 = sand.u32 %s394, 1
          %s2099 = smul.addr %s2098, 8
          %s2100 = scalar_lea.vmem [#allocation8], %s2099
          %2101 = dma.done %s2097, 128
        $region96: #{tpu_custom_call.1} parent=91 // pred_fallthru
          _
      $region92: #{tpu_custom_call.1} parent=5 // pred_fallthru
        _
    $region6: #{tpu_custom_call.1} parent=1 // loop_footer
      %s34 = sadd.s32 1, %s30
    $region7: #{tpu_custom_call.1} parent=1 // loop_footer_branch
      %29 = sbr.rel target = $region3
    $region8: #{tpu_custom_call.1} parent=1 // loop_exit
      _
    %2102 = vsyncpa [#allocation6], 1
    %s2103 = scalar_lea.sflag [#allocation6], 1
    %2104 = vsyncpa %s2103, 1
    %2105 = vsyncpa [#allocation7], 1
    %s2106 = scalar_lea.sflag [#allocation7], 1
    %2107 = vsyncpa %s2106, 1

</llo_original>
